<compile_context>
chip_gen: v5e
topology: v5e:2x2
jax: 0.10.0
libtpu: 0.0.40
codegen_flags: <defaults>
</compile_context>

<pallas_src>
import jax
import jax.numpy as jnp
from jax.experimental import pallas as pl
from jax.experimental.pallas import tpu as pltpu  # noqa: F401  (TPU backend)

# ---------------- configuration (small, consistent with the module) ----------------
B, S = 2, 8                # batch, target sequence length
D_MODEL = 32               # d_model == d_word_vec
D_INNER = 64
N_LAYERS = 2
N_HEAD = 4
D_K = 8
D_V = 8
N_POSITION = 200
ORDER_SIZE = 3 + 1         # order_size arg = 3  -> decoder.order_size = 4
TILE_SIZE = 7 + 1          # tile_size  arg = 7  -> decoder.tile_size  = 8
NUM_PRIMES = 2
EPS = 1e-6
SCALE_PRJ = D_MODEL ** -0.5    # trg_emb_prj_weight_sharing=True, scale_emb_or_prj='prj'
HD = N_HEAD * D_K              # per-tensor (q/k/v) projection width
TOTAL_OUT = ORDER_SIZE + NUM_PRIMES * TILE_SIZE + TILE_SIZE   # 4 + 16 + 8 = 28 fused logits


# ---------------- in-kernel helpers ----------------
def _layer_norm(x, g, b):
    mu = jnp.mean(x, axis=-1, keepdims=True)
    var = jnp.mean((x - mu) ** 2, axis=-1, keepdims=True)
    return (x - mu) * jax.lax.rsqrt(var + EPS) * g + b


def _softmax(x):
    m = jnp.max(x, axis=-1, keepdims=True)
    e = jnp.exp(x - m)
    # reciprocal on the EUP slot (essentially free) instead of a VALU divide
    return e * pl.reciprocal(jnp.sum(e, axis=-1, keepdims=True), approx=True)


# ---------------- the Pallas kernel (single invocation, whole model) ----------------
def decoder_kernel(x_ref, ln0g_ref, ln0b_ref,
                   wqkv_ref, wo_ref, ln1g_ref, ln1b_ref,
                   w1_ref, b1_ref, w2_ref, b2_ref, ln2g_ref, ln2b_ref,
                   wprj_ref, out_ref):
    # x_ref: [B*S, D] = token embeddings + positional encoding (dropout == identity, eval mode).
    # TODO(synk): training-mode dropout is not implemented (eval / p-inactive path only).
    x = _layer_norm(x_ref[...], ln0g_ref[...], ln0b_ref[...])       # decoder-level LayerNorm

    inv_sqrt_dk = 1.0 / (D_K ** 0.5)
    for l in range(N_LAYERS):
        # ---- multi-head self-attention (slf_attn_mask is None, matching the module) ----
        residual = x
        # fused QKV: one (B*S, D) @ (D, 3*H*Dk) matmul per layer
        qkv = jnp.dot(x, wqkv_ref[l], preferred_element_type=jnp.float32)   # [B*S, 3*H*Dk]
        heads = []
        for h in range(N_HEAD):
            # leading-dim reshape (B*S -> B, S) is a clean sublane-tile split; no lane movement
            qh = (qkv[:, h * D_K:(h + 1) * D_K] * inv_sqrt_dk).reshape(B, S, D_K)
            kh = qkv[:, HD + h * D_K: HD + (h + 1) * D_K].reshape(B, S, D_K)
            vh = qkv[:, 2 * HD + h * D_V: 2 * HD + (h + 1) * D_V].reshape(B, S, D_V)
            s = jnp.einsum('bqd,bkd->bqk', qh, kh,
                           preferred_element_type=jnp.float32)              # [B, S, S]
            p = _softmax(s)
            oh = jnp.einsum('bqk,bkd->bqd', p, vh,
                            preferred_element_type=jnp.float32)             # [B, S, Dv]
            heads.append(oh.reshape(B * S, D_V))
        o = jnp.concatenate(heads, axis=1)                                  # [B*S, H*Dv]
        o = jnp.dot(o, wo_ref[l], preferred_element_type=jnp.float32) + residual
        x = _layer_norm(o, ln1g_ref[l], ln1b_ref[l])

        # ---- position-wise feed forward ----
        residual2 = x
        h1 = jnp.maximum(
            jnp.dot(x, w1_ref[l], preferred_element_type=jnp.float32) + b1_ref[l], 0.0)
        h2 = jnp.dot(h1, w2_ref[l], preferred_element_type=jnp.float32) + b2_ref[l]
        x = _layer_norm(h2 + residual2, ln2g_ref[l], ln2b_ref[l])

    # take last position of every sequence: dec_output[:, -1, :]
    dec = jnp.concatenate([x[b * S + S - 1: b * S + S, :] for b in range(B)], axis=0)  # [B, D]

    # fused shared-weight projections (order | tile_0..tile_{P-1} | sp_tile2), weights are
    # pre-transposed & concatenated in the wrapper -> one matmul, one lane-contiguous store.
    out_ref[...] = jnp.dot(dec, wprj_ref[...],
                           preferred_element_type=jnp.float32) * SCALE_PRJ


# ---------------- parameter construction (deterministic) ----------------
def _xavier(key, shape):
    fan_in, fan_out = shape[-2], shape[-1]
    bound = (6.0 / (fan_in + fan_out)) ** 0.5
    return jax.random.uniform(key, shape, jnp.float32, -bound, bound)


def _sinusoid_table(n_position, d_hid):
    position = jnp.arange(n_position, dtype=jnp.float32)[:, None]
    hid = jnp.arange(d_hid)[None, :]
    exponent = (2 * (hid // 2)).astype(jnp.float32) / d_hid
    angle = position / jnp.power(10000.0, exponent)
    return jnp.where(hid % 2 == 0, jnp.sin(angle), jnp.cos(angle)).astype(jnp.float32)


def init_params(key):
    ks = jax.random.split(key, 16)
    p = {}
    p["order_emb"] = _xavier(ks[0], (ORDER_SIZE, D_MODEL))
    p["tile_emb"] = _xavier(ks[1], (NUM_PRIMES, TILE_SIZE, D_MODEL))
    p["sp_emb"] = _xavier(ks[2], (TILE_SIZE, D_MODEL))
    p["pos_table"] = _sinusoid_table(N_POSITION, D_MODEL)
    p["ln0_g"] = jnp.ones((1, D_MODEL), jnp.float32)
    p["ln0_b"] = jnp.zeros((1, D_MODEL), jnp.float32)
    # per-layer weights stacked on a leading layer axis
    p["wq"] = _xavier(ks[3], (N_LAYERS, D_MODEL, N_HEAD * D_K))
    p["wk"] = _xavier(ks[4], (N_LAYERS, D_MODEL, N_HEAD * D_K))
    p["wv"] = _xavier(ks[5], (N_LAYERS, D_MODEL, N_HEAD * D_V))
    p["wo"] = _xavier(ks[6], (N_LAYERS, N_HEAD * D_V, D_MODEL))
    p["ln1_g"] = jnp.ones((N_LAYERS, 1, D_MODEL), jnp.float32)
    p["ln1_b"] = jnp.zeros((N_LAYERS, 1, D_MODEL), jnp.float32)
    p["w1"] = _xavier(ks[7], (N_LAYERS, D_MODEL, D_INNER))
    p["b1"] = jax.random.uniform(ks[8], (N_LAYERS, 1, D_INNER), jnp.float32, -0.05, 0.05)
    p["w2"] = _xavier(ks[9], (N_LAYERS, D_INNER, D_MODEL))
    p["b2"] = jax.random.uniform(ks[10], (N_LAYERS, 1, D_MODEL), jnp.float32, -0.05, 0.05)
    p["ln2_g"] = jnp.ones((N_LAYERS, 1, D_MODEL), jnp.float32)
    p["ln2_b"] = jnp.zeros((N_LAYERS, 1, D_MODEL), jnp.float32)
    return p


# ---------------- wrapper: glue + single grid-less pallas_call ----------------
def transformer_forward(trg_seq, params):
    # embedding sum + positional encoding (plain-JAX gather glue); padding_idx None, scale_emb False
    x_emb = params["order_emb"][trg_seq[:, :, 0]]                       # [B, S, D]
    for i in range(NUM_PRIMES):
        x_emb = x_emb + params["tile_emb"][i][trg_seq[:, :, i + 1]]
    x_emb = x_emb + params["sp_emb"][trg_seq[:, :, NUM_PRIMES + 1]]
    x = (x_emb + params["pos_table"][None, :S, :]).reshape(B * S, D_MODEL)   # batch folded

    # fused QKV weight: (L, D, 3*H*Dk); fused & pre-transposed projection weight: (D, 28)
    wqkv = jnp.concatenate([params["wq"], params["wk"], params["wv"]], axis=-1)
    w_prj = jnp.concatenate(
        [params["order_emb"].T]
        + [params["tile_emb"][i].T for i in range(NUM_PRIMES)]
        + [params["sp_emb"].T],
        axis=1)                                                          # [D, TOTAL_OUT]

    # single kernel invocation: everything fits trivially in VMEM (<100 KB), so no grid, no tiling —
    # default full-array BlockSpecs place every operand in VMEM once.
    logits = pl.pallas_call(
        decoder_kernel,
        out_shape=jax.ShapeDtypeStruct((B, TOTAL_OUT), jnp.float32),
    )(x,
      params["ln0_g"], params["ln0_b"],
      wqkv, params["wo"],
      params["ln1_g"], params["ln1_b"],
      params["w1"], params["b1"], params["w2"], params["b2"],
      params["ln2_g"], params["ln2_b"],
      w_prj)

    order_logit = logits[:, :ORDER_SIZE]                                             # [B, order]
    tile_logits = logits[:, ORDER_SIZE:ORDER_SIZE + NUM_PRIMES * TILE_SIZE]
    tile_logits = tile_logits.reshape(B, NUM_PRIMES, TILE_SIZE)                      # [B, P, T]
    sp_tile2_logit = logits[:, ORDER_SIZE + NUM_PRIMES * TILE_SIZE:]                 # [B, T]
    return order_logit, tile_logits, sp_tile2_logit


if __name__ == "__main__":
    key = jax.random.PRNGKey(0)
    k_par, k_ord, k_tile, k_sp = jax.random.split(key, 4)

    params = init_params(k_par)

    # trg_seq: int32 [B, S, num_primes + 2]
    order_idx = jax.random.randint(k_ord, (B, S, 1), 0, ORDER_SIZE, dtype=jnp.int32)
    tile_idx = jax.random.randint(k_tile, (B, S, NUM_PRIMES), 0, TILE_SIZE, dtype=jnp.int32)
    sp_idx = jax.random.randint(k_sp, (B, S, 1), 0, TILE_SIZE, dtype=jnp.int32)
    trg_seq = jnp.concatenate([order_idx, tile_idx, sp_idx], axis=-1)

    order_logit, tile_logits, sp_tile2_logit = transformer_forward(trg_seq, params)
    jax.block_until_ready((order_logit, tile_logits, sp_tile2_logit))

    assert order_logit.shape == (B, ORDER_SIZE)
    assert tile_logits.shape == (B, NUM_PRIMES, TILE_SIZE)
    assert sp_tile2_logit.shape == (B, TILE_SIZE)
    print("KERNEL_OK")
</pallas_src>

<mosaic_0001>
module attributes {stable_mosaic.version = 11 : i64} {
  func.func @decoder_kernel(%arg0: memref<16x32xf32, #tpu.memory_space<vmem>>, %arg1: memref<1x32xf32, #tpu.memory_space<vmem>>, %arg2: memref<1x32xf32, #tpu.memory_space<vmem>>, %arg3: memref<2x32x96xf32, #tpu.memory_space<vmem>>, %arg4: memref<2x32x32xf32, #tpu.memory_space<vmem>>, %arg5: memref<2x1x32xf32, #tpu.memory_space<vmem>>, %arg6: memref<2x1x32xf32, #tpu.memory_space<vmem>>, %arg7: memref<2x32x64xf32, #tpu.memory_space<vmem>>, %arg8: memref<2x1x64xf32, #tpu.memory_space<vmem>>, %arg9: memref<2x64x32xf32, #tpu.memory_space<vmem>>, %arg10: memref<2x1x32xf32, #tpu.memory_space<vmem>>, %arg11: memref<2x1x32xf32, #tpu.memory_space<vmem>>, %arg12: memref<2x1x32xf32, #tpu.memory_space<vmem>>, %arg13: memref<32x28xf32, #tpu.memory_space<vmem>>, %arg14: memref<2x28xf32, #tpu.memory_space<vmem>>) attributes {dimension_semantics = [], scalar_prefetch = 0 : i64, scratch_operands = 0 : i64, tpu.core_type = #tpu.core_type<tc>} {
    %c0 = arith.constant 0 : index
    %c0_0 = arith.constant 0 : index
    %0 = vector.load %arg0[%c0, %c0_0] : memref<16x32xf32, #tpu.memory_space<vmem>>, vector<16x32xf32>
    %c0_1 = arith.constant 0 : index
    %c0_2 = arith.constant 0 : index
    %1 = vector.load %arg1[%c0_1, %c0_2] : memref<1x32xf32, #tpu.memory_space<vmem>>, vector<1x32xf32>
    %c0_3 = arith.constant 0 : index
    %c0_4 = arith.constant 0 : index
    %2 = vector.load %arg2[%c0_3, %c0_4] : memref<1x32xf32, #tpu.memory_space<vmem>>, vector<1x32xf32>
    %cst = arith.constant dense<0.000000e+00> : vector<16xf32>
    %3 = vector.multi_reduction <add>, %0, %cst [1] : vector<16x32xf32> to vector<16xf32>
    %4 = vector.shape_cast %3 : vector<16xf32> to vector<16x1xf32>
    %cst_5 = arith.constant 3.200000e+01 : f32
    %5 = vector.broadcast %cst_5 : f32 to vector<16x1xf32>
    %6 = arith.divf %4, %5 : vector<16x1xf32>
    %7 = vector.broadcast %6 : vector<16x1xf32> to vector<16x32xf32>
    %8 = arith.subf %0, %7 : vector<16x32xf32>
    %9 = arith.mulf %8, %8 : vector<16x32xf32>
    %cst_6 = arith.constant dense<0.000000e+00> : vector<16xf32>
    %10 = vector.multi_reduction <add>, %9, %cst_6 [1] : vector<16x32xf32> to vector<16xf32>
    %11 = vector.shape_cast %10 : vector<16xf32> to vector<16x1xf32>
    %cst_7 = arith.constant 3.200000e+01 : f32
    %12 = vector.broadcast %cst_7 : f32 to vector<16x1xf32>
    %13 = arith.divf %11, %12 : vector<16x1xf32>
    %14 = vector.broadcast %6 : vector<16x1xf32> to vector<16x32xf32>
    %15 = arith.subf %0, %14 : vector<16x32xf32>
    %cst_8 = arith.constant 9.99999997E-7 : f32
    %16 = vector.broadcast %cst_8 : f32 to vector<16x1xf32>
    %17 = arith.addf %13, %16 : vector<16x1xf32>
    %18 = math.rsqrt %17 : vector<16x1xf32>
    %19 = vector.broadcast %18 : vector<16x1xf32> to vector<16x32xf32>
    %20 = arith.mulf %15, %19 : vector<16x32xf32>
    %21 = vector.broadcast %1 : vector<1x32xf32> to vector<16x32xf32>
    %22 = arith.mulf %20, %21 : vector<16x32xf32>
    %23 = vector.broadcast %2 : vector<1x32xf32> to vector<16x32xf32>
    %24 = arith.addf %22, %23 : vector<16x32xf32>
    %c0_9 = arith.constant 0 : index
    %c0_10 = arith.constant 0 : index
    %c0_11 = arith.constant 0 : index
    %25 = vector.load %arg3[%c0_9, %c0_10, %c0_11] : memref<2x32x96xf32, #tpu.memory_space<vmem>>, vector<1x32x96xf32>
    %26 = vector.shape_cast %25 : vector<1x32x96xf32> to vector<32x96xf32>
    %cst_12 = arith.constant dense<0.000000e+00> : vector<16x96xf32>
    %27 = tpu.matmul %24, %26, %cst_12 {dimension_numbers = #tpu.dot_dimension_numbers<[1], [0], [0], [1], [0, 0, 1, 1], [], []>} : vector<16x32xf32>, vector<32x96xf32>, vector<16x96xf32> -> vector<16x96xf32>
    %28 = vector.extract_strided_slice %27 {offsets = [0, 0], sizes = [16, 8], strides = [1, 1]} : vector<16x96xf32> to vector<16x8xf32>
    %cst_13 = arith.constant 0.353553385 : f32
    %29 = vector.broadcast %cst_13 : f32 to vector<16x8xf32>
    %30 = arith.mulf %28, %29 : vector<16x8xf32>
    %31 = vector.shape_cast %30 : vector<16x8xf32> to vector<2x8x8xf32>
    %32 = vector.extract_strided_slice %27 {offsets = [0, 32], sizes = [16, 8], strides = [1, 1]} : vector<16x96xf32> to vector<16x8xf32>
    %33 = vector.shape_cast %32 : vector<16x8xf32> to vector<2x8x8xf32>
    %34 = vector.extract_strided_slice %27 {offsets = [0, 64], sizes = [16, 8], strides = [1, 1]} : vector<16x96xf32> to vector<16x8xf32>
    %35 = vector.shape_cast %34 : vector<16x8xf32> to vector<2x8x8xf32>
    "tpu.trace_start"() <{level = 10 : i32, message = "bqd,bkd->bqk"}> : () -> ()
    %cst_14 = arith.constant dense<0.000000e+00> : vector<2x8x8xf32>
    %36 = tpu.matmul %31, %33, %cst_14 {dimension_numbers = #tpu.dot_dimension_numbers<[2], [2], [1], [1], [0, 0, 0, 1, 1, 1], [0], [0]>} : vector<2x8x8xf32>, vector<2x8x8xf32>, vector<2x8x8xf32> -> vector<2x8x8xf32>
    "tpu.trace_stop"() : () -> ()
    %cst_15 = arith.constant dense<0xFF800000> : vector<2x8xf32>
    %37 = vector.multi_reduction <maximumf>, %36, %cst_15 [2] : vector<2x8x8xf32> to vector<2x8xf32>
    %38 = vector.shape_cast %37 : vector<2x8xf32> to vector<2x8x1xf32>
    %39 = vector.broadcast %38 : vector<2x8x1xf32> to vector<2x8x8xf32>
    %40 = arith.subf %36, %39 : vector<2x8x8xf32>
    %41 = math.exp %40 : vector<2x8x8xf32>
    %cst_16 = arith.constant dense<0.000000e+00> : vector<2x8xf32>
    %42 = vector.multi_reduction <add>, %41, %cst_16 [2] : vector<2x8x8xf32> to vector<2x8xf32>
    %43 = vector.shape_cast %42 : vector<2x8xf32> to vector<2x8x1xf32>
    %44 = tpu.reciprocal %43 {approx = true} : vector<2x8x1xf32> -> vector<2x8x1xf32>
    %45 = vector.broadcast %44 : vector<2x8x1xf32> to vector<2x8x8xf32>
    %46 = arith.mulf %41, %45 : vector<2x8x8xf32>
    "tpu.trace_start"() <{level = 10 : i32, message = "bqk,bkd->bqd"}> : () -> ()
    %cst_17 = arith.constant dense<0.000000e+00> : vector<2x8x8xf32>
    %47 = tpu.matmul %46, %35, %cst_17 {dimension_numbers = #tpu.dot_dimension_numbers<[2], [1], [1], [2], [0, 0, 0, 1, 1, 2], [0], [0]>} : vector<2x8x8xf32>, vector<2x8x8xf32>, vector<2x8x8xf32> -> vector<2x8x8xf32>
    "tpu.trace_stop"() : () -> ()
    %48 = vector.shape_cast %47 : vector<2x8x8xf32> to vector<16x8xf32>
    %49 = vector.extract_strided_slice %27 {offsets = [0, 8], sizes = [16, 8], strides = [1, 1]} : vector<16x96xf32> to vector<16x8xf32>
    %cst_18 = arith.constant 0.353553385 : f32
    %50 = vector.broadcast %cst_18 : f32 to vector<16x8xf32>
    %51 = arith.mulf %49, %50 : vector<16x8xf32>
    %52 = vector.shape_cast %51 : vector<16x8xf32> to vector<2x8x8xf32>
    %53 = vector.extract_strided_slice %27 {offsets = [0, 40], sizes = [16, 8], strides = [1, 1]} : vector<16x96xf32> to vector<16x8xf32>
    %54 = vector.shape_cast %53 : vector<16x8xf32> to vector<2x8x8xf32>
    %55 = vector.extract_strided_slice %27 {offsets = [0, 72], sizes = [16, 8], strides = [1, 1]} : vector<16x96xf32> to vector<16x8xf32>
    %56 = vector.shape_cast %55 : vector<16x8xf32> to vector<2x8x8xf32>
    "tpu.trace_start"() <{level = 10 : i32, message = "bqd,bkd->bqk"}> : () -> ()
    %cst_19 = arith.constant dense<0.000000e+00> : vector<2x8x8xf32>
    %57 = tpu.matmul %52, %54, %cst_19 {dimension_numbers = #tpu.dot_dimension_numbers<[2], [2], [1], [1], [0, 0, 0, 1, 1, 1], [0], [0]>} : vector<2x8x8xf32>, vector<2x8x8xf32>, vector<2x8x8xf32> -> vector<2x8x8xf32>
    "tpu.trace_stop"() : () -> ()
    %cst_20 = arith.constant dense<0xFF800000> : vector<2x8xf32>
    %58 = vector.multi_reduction <maximumf>, %57, %cst_20 [2] : vector<2x8x8xf32> to vector<2x8xf32>
    %59 = vector.shape_cast %58 : vector<2x8xf32> to vector<2x8x1xf32>
    %60 = vector.broadcast %59 : vector<2x8x1xf32> to vector<2x8x8xf32>
    %61 = arith.subf %57, %60 : vector<2x8x8xf32>
    %62 = math.exp %61 : vector<2x8x8xf32>
    %cst_21 = arith.constant dense<0.000000e+00> : vector<2x8xf32>
    %63 = vector.multi_reduction <add>, %62, %cst_21 [2] : vector<2x8x8xf32> to vector<2x8xf32>
    %64 = vector.shape_cast %63 : vector<2x8xf32> to vector<2x8x1xf32>
    %65 = tpu.reciprocal %64 {approx = true} : vector<2x8x1xf32> -> vector<2x8x1xf32>
    %66 = vector.broadcast %65 : vector<2x8x1xf32> to vector<2x8x8xf32>
    %67 = arith.mulf %62, %66 : vector<2x8x8xf32>
    "tpu.trace_start"() <{level = 10 : i32, message = "bqk,bkd->bqd"}> : () -> ()
    %cst_22 = arith.constant dense<0.000000e+00> : vector<2x8x8xf32>
    %68 = tpu.matmul %67, %56, %cst_22 {dimension_numbers = #tpu.dot_dimension_numbers<[2], [1], [1], [2], [0, 0, 0, 1, 1, 2], [0], [0]>} : vector<2x8x8xf32>, vector<2x8x8xf32>, vector<2x8x8xf32> -> vector<2x8x8xf32>
    "tpu.trace_stop"() : () -> ()
    %69 = vector.shape_cast %68 : vector<2x8x8xf32> to vector<16x8xf32>
    %70 = vector.extract_strided_slice %27 {offsets = [0, 16], sizes = [16, 8], strides = [1, 1]} : vector<16x96xf32> to vector<16x8xf32>
    %cst_23 = arith.constant 0.353553385 : f32
    %71 = vector.broadcast %cst_23 : f32 to vector<16x8xf32>
    %72 = arith.mulf %70, %71 : vector<16x8xf32>
    %73 = vector.shape_cast %72 : vector<16x8xf32> to vector<2x8x8xf32>
    %74 = vector.extract_strided_slice %27 {offsets = [0, 48], sizes = [16, 8], strides = [1, 1]} : vector<16x96xf32> to vector<16x8xf32>
    %75 = vector.shape_cast %74 : vector<16x8xf32> to vector<2x8x8xf32>
    %76 = vector.extract_strided_slice %27 {offsets = [0, 80], sizes = [16, 8], strides = [1, 1]} : vector<16x96xf32> to vector<16x8xf32>
    %77 = vector.shape_cast %76 : vector<16x8xf32> to vector<2x8x8xf32>
    "tpu.trace_start"() <{level = 10 : i32, message = "bqd,bkd->bqk"}> : () -> ()
    %cst_24 = arith.constant dense<0.000000e+00> : vector<2x8x8xf32>
    %78 = tpu.matmul %73, %75, %cst_24 {dimension_numbers = #tpu.dot_dimension_numbers<[2], [2], [1], [1], [0, 0, 0, 1, 1, 1], [0], [0]>} : vector<2x8x8xf32>, vector<2x8x8xf32>, vector<2x8x8xf32> -> vector<2x8x8xf32>
    "tpu.trace_stop"() : () -> ()
    %cst_25 = arith.constant dense<0xFF800000> : vector<2x8xf32>
    %79 = vector.multi_reduction <maximumf>, %78, %cst_25 [2] : vector<2x8x8xf32> to vector<2x8xf32>
    %80 = vector.shape_cast %79 : vector<2x8xf32> to vector<2x8x1xf32>
    %81 = vector.broadcast %80 : vector<2x8x1xf32> to vector<2x8x8xf32>
    %82 = arith.subf %78, %81 : vector<2x8x8xf32>
    %83 = math.exp %82 : vector<2x8x8xf32>
    %cst_26 = arith.constant dense<0.000000e+00> : vector<2x8xf32>
    %84 = vector.multi_reduction <add>, %83, %cst_26 [2] : vector<2x8x8xf32> to vector<2x8xf32>
    %85 = vector.shape_cast %84 : vector<2x8xf32> to vector<2x8x1xf32>
    %86 = tpu.reciprocal %85 {approx = true} : vector<2x8x1xf32> -> vector<2x8x1xf32>
    %87 = vector.broadcast %86 : vector<2x8x1xf32> to vector<2x8x8xf32>
    %88 = arith.mulf %83, %87 : vector<2x8x8xf32>
    "tpu.trace_start"() <{level = 10 : i32, message = "bqk,bkd->bqd"}> : () -> ()
    %cst_27 = arith.constant dense<0.000000e+00> : vector<2x8x8xf32>
    %89 = tpu.matmul %88, %77, %cst_27 {dimension_numbers = #tpu.dot_dimension_numbers<[2], [1], [1], [2], [0, 0, 0, 1, 1, 2], [0], [0]>} : vector<2x8x8xf32>, vector<2x8x8xf32>, vector<2x8x8xf32> -> vector<2x8x8xf32>
    "tpu.trace_stop"() : () -> ()
    %90 = vector.shape_cast %89 : vector<2x8x8xf32> to vector<16x8xf32>
    %91 = vector.extract_strided_slice %27 {offsets = [0, 24], sizes = [16, 8], strides = [1, 1]} : vector<16x96xf32> to vector<16x8xf32>
    %cst_28 = arith.constant 0.353553385 : f32
    %92 = vector.broadcast %cst_28 : f32 to vector<16x8xf32>
    %93 = arith.mulf %91, %92 : vector<16x8xf32>
    %94 = vector.shape_cast %93 : vector<16x8xf32> to vector<2x8x8xf32>
    %95 = vector.extract_strided_slice %27 {offsets = [0, 56], sizes = [16, 8], strides = [1, 1]} : vector<16x96xf32> to vector<16x8xf32>
    %96 = vector.shape_cast %95 : vector<16x8xf32> to vector<2x8x8xf32>
    %97 = vector.extract_strided_slice %27 {offsets = [0, 88], sizes = [16, 8], strides = [1, 1]} : vector<16x96xf32> to vector<16x8xf32>
    %98 = vector.shape_cast %97 : vector<16x8xf32> to vector<2x8x8xf32>
    "tpu.trace_start"() <{level = 10 : i32, message = "bqd,bkd->bqk"}> : () -> ()
    %cst_29 = arith.constant dense<0.000000e+00> : vector<2x8x8xf32>
    %99 = tpu.matmul %94, %96, %cst_29 {dimension_numbers = #tpu.dot_dimension_numbers<[2], [2], [1], [1], [0, 0, 0, 1, 1, 1], [0], [0]>} : vector<2x8x8xf32>, vector<2x8x8xf32>, vector<2x8x8xf32> -> vector<2x8x8xf32>
    "tpu.trace_stop"() : () -> ()
    %cst_30 = arith.constant dense<0xFF800000> : vector<2x8xf32>
    %100 = vector.multi_reduction <maximumf>, %99, %cst_30 [2] : vector<2x8x8xf32> to vector<2x8xf32>
    %101 = vector.shape_cast %100 : vector<2x8xf32> to vector<2x8x1xf32>
    %102 = vector.broadcast %101 : vector<2x8x1xf32> to vector<2x8x8xf32>
    %103 = arith.subf %99, %102 : vector<2x8x8xf32>
    %104 = math.exp %103 : vector<2x8x8xf32>
    %cst_31 = arith.constant dense<0.000000e+00> : vector<2x8xf32>
    %105 = vector.multi_reduction <add>, %104, %cst_31 [2] : vector<2x8x8xf32> to vector<2x8xf32>
    %106 = vector.shape_cast %105 : vector<2x8xf32> to vector<2x8x1xf32>
    %107 = tpu.reciprocal %106 {approx = true} : vector<2x8x1xf32> -> vector<2x8x1xf32>
    %108 = vector.broadcast %107 : vector<2x8x1xf32> to vector<2x8x8xf32>
    %109 = arith.mulf %104, %108 : vector<2x8x8xf32>
    "tpu.trace_start"() <{level = 10 : i32, message = "bqk,bkd->bqd"}> : () -> ()
    %cst_32 = arith.constant dense<0.000000e+00> : vector<2x8x8xf32>
    %110 = tpu.matmul %109, %98, %cst_32 {dimension_numbers = #tpu.dot_dimension_numbers<[2], [1], [1], [2], [0, 0, 0, 1, 1, 2], [0], [0]>} : vector<2x8x8xf32>, vector<2x8x8xf32>, vector<2x8x8xf32> -> vector<2x8x8xf32>
    "tpu.trace_stop"() : () -> ()
    %111 = vector.shape_cast %110 : vector<2x8x8xf32> to vector<16x8xf32>
    %112 = tpu.concatenate %48, %69, %90, %111 in 1 : vector<16x8xf32>, vector<16x8xf32>, vector<16x8xf32>, vector<16x8xf32> -> vector<16x32xf32>
    %c0_33 = arith.constant 0 : index
    %c0_34 = arith.constant 0 : index
    %c0_35 = arith.constant 0 : index
    %113 = vector.load %arg4[%c0_33, %c0_34, %c0_35] : memref<2x32x32xf32, #tpu.memory_space<vmem>>, vector<1x32x32xf32>
    %114 = vector.shape_cast %113 : vector<1x32x32xf32> to vector<32x32xf32>
    %cst_36 = arith.constant dense<0.000000e+00> : vector<16x32xf32>
    %115 = tpu.matmul %112, %114, %cst_36 {dimension_numbers = #tpu.dot_dimension_numbers<[1], [0], [0], [1], [0, 0, 1, 1], [], []>} : vector<16x32xf32>, vector<32x32xf32>, vector<16x32xf32> -> vector<16x32xf32>
    %116 = arith.addf %115, %24 : vector<16x32xf32>
    %c0_37 = arith.constant 0 : index
    %c0_38 = arith.constant 0 : index
    %c0_39 = arith.constant 0 : index
    %117 = vector.load %arg5[%c0_37, %c0_38, %c0_39] : memref<2x1x32xf32, #tpu.memory_space<vmem>>, vector<1x1x32xf32>
    %118 = vector.shape_cast %117 : vector<1x1x32xf32> to vector<1x32xf32>
    %c0_40 = arith.constant 0 : index
    %c0_41 = arith.constant 0 : index
    %c0_42 = arith.constant 0 : index
    %119 = vector.load %arg6[%c0_40, %c0_41, %c0_42] : memref<2x1x32xf32, #tpu.memory_space<vmem>>, vector<1x1x32xf32>
    %120 = vector.shape_cast %119 : vector<1x1x32xf32> to vector<1x32xf32>
    %cst_43 = arith.constant dense<0.000000e+00> : vector<16xf32>
    %121 = vector.multi_reduction <add>, %116, %cst_43 [1] : vector<16x32xf32> to vector<16xf32>
    %122 = vector.shape_cast %121 : vector<16xf32> to vector<16x1xf32>
    %cst_44 = arith.constant 3.200000e+01 : f32
    %123 = vector.broadcast %cst_44 : f32 to vector<16x1xf32>
    %124 = arith.divf %122, %123 : vector<16x1xf32>
    %125 = vector.broadcast %124 : vector<16x1xf32> to vector<16x32xf32>
    %126 = arith.subf %116, %125 : vector<16x32xf32>
    %127 = arith.mulf %126, %126 : vector<16x32xf32>
    %cst_45 = arith.constant dense<0.000000e+00> : vector<16xf32>
    %128 = vector.multi_reduction <add>, %127, %cst_45 [1] : vector<16x32xf32> to vector<16xf32>
    %129 = vector.shape_cast %128 : vector<16xf32> to vector<16x1xf32>
    %cst_46 = arith.constant 3.200000e+01 : f32
    %130 = vector.broadcast %cst_46 : f32 to vector<16x1xf32>
    %131 = arith.divf %129, %130 : vector<16x1xf32>
    %132 = vector.broadcast %124 : vector<16x1xf32> to vector<16x32xf32>
    %133 = arith.subf %116, %132 : vector<16x32xf32>
    %cst_47 = arith.constant 9.99999997E-7 : f32
    %134 = vector.broadcast %cst_47 : f32 to vector<16x1xf32>
    %135 = arith.addf %131, %134 : vector<16x1xf32>
    %136 = math.rsqrt %135 : vector<16x1xf32>
    %137 = vector.broadcast %136 : vector<16x1xf32> to vector<16x32xf32>
    %138 = arith.mulf %133, %137 : vector<16x32xf32>
    %139 = vector.broadcast %118 : vector<1x32xf32> to vector<16x32xf32>
    %140 = arith.mulf %138, %139 : vector<16x32xf32>
    %141 = vector.broadcast %120 : vector<1x32xf32> to vector<16x32xf32>
    %142 = arith.addf %140, %141 : vector<16x32xf32>
    %c0_48 = arith.constant 0 : index
    %c0_49 = arith.constant 0 : index
    %c0_50 = arith.constant 0 : index
    %143 = vector.load %arg7[%c0_48, %c0_49, %c0_50] : memref<2x32x64xf32, #tpu.memory_space<vmem>>, vector<1x32x64xf32>
    %144 = vector.shape_cast %143 : vector<1x32x64xf32> to vector<32x64xf32>
    %cst_51 = arith.constant dense<0.000000e+00> : vector<16x64xf32>
    %145 = tpu.matmul %142, %144, %cst_51 {dimension_numbers = #tpu.dot_dimension_numbers<[1], [0], [0], [1], [0, 0, 1, 1], [], []>} : vector<16x32xf32>, vector<32x64xf32>, vector<16x64xf32> -> vector<16x64xf32>
    %c0_52 = arith.constant 0 : index
    %c0_53 = arith.constant 0 : index
    %c0_54 = arith.constant 0 : index
    %146 = vector.load %arg8[%c0_52, %c0_53, %c0_54] : memref<2x1x64xf32, #tpu.memory_space<vmem>>, vector<1x1x64xf32>
    %147 = vector.shape_cast %146 : vector<1x1x64xf32> to vector<1x64xf32>
    %148 = vector.broadcast %147 : vector<1x64xf32> to vector<16x64xf32>
    %149 = arith.addf %145, %148 : vector<16x64xf32>
    %cst_55 = arith.constant 0.000000e+00 : f32
    %150 = vector.broadcast %cst_55 : f32 to vector<16x64xf32>
    %151 = arith.maximumf %149, %150 : vector<16x64xf32>
    %c0_56 = arith.constant 0 : index
    %c0_57 = arith.constant 0 : index
    %c0_58 = arith.constant 0 : index
    %152 = vector.load %arg9[%c0_56, %c0_57, %c0_58] : memref<2x64x32xf32, #tpu.memory_space<vmem>>, vector<1x64x32xf32>
    %153 = vector.shape_cast %152 : vector<1x64x32xf32> to vector<64x32xf32>
    %cst_59 = arith.constant dense<0.000000e+00> : vector<16x32xf32>
    %154 = tpu.matmul %151, %153, %cst_59 {dimension_numbers = #tpu.dot_dimension_numbers<[1], [0], [0], [1], [0, 0, 1, 1], [], []>} : vector<16x64xf32>, vector<64x32xf32>, vector<16x32xf32> -> vector<16x32xf32>
    %c0_60 = arith.constant 0 : index
    %c0_61 = arith.constant 0 : index
    %c0_62 = arith.constant 0 : index
    %155 = vector.load %arg10[%c0_60, %c0_61, %c0_62] : memref<2x1x32xf32, #tpu.memory_space<vmem>>, vector<1x1x32xf32>
    %156 = vector.shape_cast %155 : vector<1x1x32xf32> to vector<1x32xf32>
    %157 = vector.broadcast %156 : vector<1x32xf32> to vector<16x32xf32>
    %158 = arith.addf %154, %157 : vector<16x32xf32>
    %159 = arith.addf %158, %142 : vector<16x32xf32>
    %c0_63 = arith.constant 0 : index
    %c0_64 = arith.constant 0 : index
    %c0_65 = arith.constant 0 : index
    %160 = vector.load %arg11[%c0_63, %c0_64, %c0_65] : memref<2x1x32xf32, #tpu.memory_space<vmem>>, vector<1x1x32xf32>
    %161 = vector.shape_cast %160 : vector<1x1x32xf32> to vector<1x32xf32>
    %c0_66 = arith.constant 0 : index
    %c0_67 = arith.constant 0 : index
    %c0_68 = arith.constant 0 : index
    %162 = vector.load %arg12[%c0_66, %c0_67, %c0_68] : memref<2x1x32xf32, #tpu.memory_space<vmem>>, vector<1x1x32xf32>
    %163 = vector.shape_cast %162 : vector<1x1x32xf32> to vector<1x32xf32>
    %cst_69 = arith.constant dense<0.000000e+00> : vector<16xf32>
    %164 = vector.multi_reduction <add>, %159, %cst_69 [1] : vector<16x32xf32> to vector<16xf32>
    %165 = vector.shape_cast %164 : vector<16xf32> to vector<16x1xf32>
    %cst_70 = arith.constant 3.200000e+01 : f32
    %166 = vector.broadcast %cst_70 : f32 to vector<16x1xf32>
    %167 = arith.divf %165, %166 : vector<16x1xf32>
    %168 = vector.broadcast %167 : vector<16x1xf32> to vector<16x32xf32>
    %169 = arith.subf %159, %168 : vector<16x32xf32>
    %170 = arith.mulf %169, %169 : vector<16x32xf32>
    %cst_71 = arith.constant dense<0.000000e+00> : vector<16xf32>
    %171 = vector.multi_reduction <add>, %170, %cst_71 [1] : vector<16x32xf32> to vector<16xf32>
    %172 = vector.shape_cast %171 : vector<16xf32> to vector<16x1xf32>
    %cst_72 = arith.constant 3.200000e+01 : f32
    %173 = vector.broadcast %cst_72 : f32 to vector<16x1xf32>
    %174 = arith.divf %172, %173 : vector<16x1xf32>
    %175 = vector.broadcast %167 : vector<16x1xf32> to vector<16x32xf32>
    %176 = arith.subf %159, %175 : vector<16x32xf32>
    %cst_73 = arith.constant 9.99999997E-7 : f32
    %177 = vector.broadcast %cst_73 : f32 to vector<16x1xf32>
    %178 = arith.addf %174, %177 : vector<16x1xf32>
    %179 = math.rsqrt %178 : vector<16x1xf32>
    %180 = vector.broadcast %179 : vector<16x1xf32> to vector<16x32xf32>
    %181 = arith.mulf %176, %180 : vector<16x32xf32>
    %182 = vector.broadcast %161 : vector<1x32xf32> to vector<16x32xf32>
    %183 = arith.mulf %181, %182 : vector<16x32xf32>
    %184 = vector.broadcast %163 : vector<1x32xf32> to vector<16x32xf32>
    %185 = arith.addf %183, %184 : vector<16x32xf32>
    %c1 = arith.constant 1 : index
    %c0_74 = arith.constant 0 : index
    %c0_75 = arith.constant 0 : index
    %186 = vector.load %arg3[%c1, %c0_74, %c0_75] : memref<2x32x96xf32, #tpu.memory_space<vmem>>, vector<1x32x96xf32>
    %187 = vector.shape_cast %186 : vector<1x32x96xf32> to vector<32x96xf32>
    %cst_76 = arith.constant dense<0.000000e+00> : vector<16x96xf32>
    %188 = tpu.matmul %185, %187, %cst_76 {dimension_numbers = #tpu.dot_dimension_numbers<[1], [0], [0], [1], [0, 0, 1, 1], [], []>} : vector<16x32xf32>, vector<32x96xf32>, vector<16x96xf32> -> vector<16x96xf32>
    %189 = vector.extract_strided_slice %188 {offsets = [0, 0], sizes = [16, 8], strides = [1, 1]} : vector<16x96xf32> to vector<16x8xf32>
    %cst_77 = arith.constant 0.353553385 : f32
    %190 = vector.broadcast %cst_77 : f32 to vector<16x8xf32>
    %191 = arith.mulf %189, %190 : vector<16x8xf32>
    %192 = vector.shape_cast %191 : vector<16x8xf32> to vector<2x8x8xf32>
    %193 = vector.extract_strided_slice %188 {offsets = [0, 32], sizes = [16, 8], strides = [1, 1]} : vector<16x96xf32> to vector<16x8xf32>
    %194 = vector.shape_cast %193 : vector<16x8xf32> to vector<2x8x8xf32>
    %195 = vector.extract_strided_slice %188 {offsets = [0, 64], sizes = [16, 8], strides = [1, 1]} : vector<16x96xf32> to vector<16x8xf32>
    %196 = vector.shape_cast %195 : vector<16x8xf32> to vector<2x8x8xf32>
    "tpu.trace_start"() <{level = 10 : i32, message = "bqd,bkd->bqk"}> : () -> ()
    %cst_78 = arith.constant dense<0.000000e+00> : vector<2x8x8xf32>
    %197 = tpu.matmul %192, %194, %cst_78 {dimension_numbers = #tpu.dot_dimension_numbers<[2], [2], [1], [1], [0, 0, 0, 1, 1, 1], [0], [0]>} : vector<2x8x8xf32>, vector<2x8x8xf32>, vector<2x8x8xf32> -> vector<2x8x8xf32>
    "tpu.trace_stop"() : () -> ()
    %cst_79 = arith.constant dense<0xFF800000> : vector<2x8xf32>
    %198 = vector.multi_reduction <maximumf>, %197, %cst_79 [2] : vector<2x8x8xf32> to vector<2x8xf32>
    %199 = vector.shape_cast %198 : vector<2x8xf32> to vector<2x8x1xf32>
    %200 = vector.broadcast %199 : vector<2x8x1xf32> to vector<2x8x8xf32>
    %201 = arith.subf %197, %200 : vector<2x8x8xf32>
    %202 = math.exp %201 : vector<2x8x8xf32>
    %cst_80 = arith.constant dense<0.000000e+00> : vector<2x8xf32>
    %203 = vector.multi_reduction <add>, %202, %cst_80 [2] : vector<2x8x8xf32> to vector<2x8xf32>
    %204 = vector.shape_cast %203 : vector<2x8xf32> to vector<2x8x1xf32>
    %205 = tpu.reciprocal %204 {approx = true} : vector<2x8x1xf32> -> vector<2x8x1xf32>
    %206 = vector.broadcast %205 : vector<2x8x1xf32> to vector<2x8x8xf32>
    %207 = arith.mulf %202, %206 : vector<2x8x8xf32>
    "tpu.trace_start"() <{level = 10 : i32, message = "bqk,bkd->bqd"}> : () -> ()
    %cst_81 = arith.constant dense<0.000000e+00> : vector<2x8x8xf32>
    %208 = tpu.matmul %207, %196, %cst_81 {dimension_numbers = #tpu.dot_dimension_numbers<[2], [1], [1], [2], [0, 0, 0, 1, 1, 2], [0], [0]>} : vector<2x8x8xf32>, vector<2x8x8xf32>, vector<2x8x8xf32> -> vector<2x8x8xf32>
    "tpu.trace_stop"() : () -> ()
    %209 = vector.shape_cast %208 : vector<2x8x8xf32> to vector<16x8xf32>
    %210 = vector.extract_strided_slice %188 {offsets = [0, 8], sizes = [16, 8], strides = [1, 1]} : vector<16x96xf32> to vector<16x8xf32>
    %cst_82 = arith.constant 0.353553385 : f32
    %211 = vector.broadcast %cst_82 : f32 to vector<16x8xf32>
    %212 = arith.mulf %210, %211 : vector<16x8xf32>
    %213 = vector.shape_cast %212 : vector<16x8xf32> to vector<2x8x8xf32>
    %214 = vector.extract_strided_slice %188 {offsets = [0, 40], sizes = [16, 8], strides = [1, 1]} : vector<16x96xf32> to vector<16x8xf32>
    %215 = vector.shape_cast %214 : vector<16x8xf32> to vector<2x8x8xf32>
    %216 = vector.extract_strided_slice %188 {offsets = [0, 72], sizes = [16, 8], strides = [1, 1]} : vector<16x96xf32> to vector<16x8xf32>
    %217 = vector.shape_cast %216 : vector<16x8xf32> to vector<2x8x8xf32>
    "tpu.trace_start"() <{level = 10 : i32, message = "bqd,bkd->bqk"}> : () -> ()
    %cst_83 = arith.constant dense<0.000000e+00> : vector<2x8x8xf32>
    %218 = tpu.matmul %213, %215, %cst_83 {dimension_numbers = #tpu.dot_dimension_numbers<[2], [2], [1], [1], [0, 0, 0, 1, 1, 1], [0], [0]>} : vector<2x8x8xf32>, vector<2x8x8xf32>, vector<2x8x8xf32> -> vector<2x8x8xf32>
    "tpu.trace_stop"() : () -> ()
    %cst_84 = arith.constant dense<0xFF800000> : vector<2x8xf32>
    %219 = vector.multi_reduction <maximumf>, %218, %cst_84 [2] : vector<2x8x8xf32> to vector<2x8xf32>
    %220 = vector.shape_cast %219 : vector<2x8xf32> to vector<2x8x1xf32>
    %221 = vector.broadcast %220 : vector<2x8x1xf32> to vector<2x8x8xf32>
    %222 = arith.subf %218, %221 : vector<2x8x8xf32>
    %223 = math.exp %222 : vector<2x8x8xf32>
    %cst_85 = arith.constant dense<0.000000e+00> : vector<2x8xf32>
    %224 = vector.multi_reduction <add>, %223, %cst_85 [2] : vector<2x8x8xf32> to vector<2x8xf32>
    %225 = vector.shape_cast %224 : vector<2x8xf32> to vector<2x8x1xf32>
    %226 = tpu.reciprocal %225 {approx = true} : vector<2x8x1xf32> -> vector<2x8x1xf32>
    %227 = vector.broadcast %226 : vector<2x8x1xf32> to vector<2x8x8xf32>
    %228 = arith.mulf %223, %227 : vector<2x8x8xf32>
    "tpu.trace_start"() <{level = 10 : i32, message = "bqk,bkd->bqd"}> : () -> ()
    %cst_86 = arith.constant dense<0.000000e+00> : vector<2x8x8xf32>
    %229 = tpu.matmul %228, %217, %cst_86 {dimension_numbers = #tpu.dot_dimension_numbers<[2], [1], [1], [2], [0, 0, 0, 1, 1, 2], [0], [0]>} : vector<2x8x8xf32>, vector<2x8x8xf32>, vector<2x8x8xf32> -> vector<2x8x8xf32>
    "tpu.trace_stop"() : () -> ()
    %230 = vector.shape_cast %229 : vector<2x8x8xf32> to vector<16x8xf32>
    %231 = vector.extract_strided_slice %188 {offsets = [0, 16], sizes = [16, 8], strides = [1, 1]} : vector<16x96xf32> to vector<16x8xf32>
    %cst_87 = arith.constant 0.353553385 : f32
    %232 = vector.broadcast %cst_87 : f32 to vector<16x8xf32>
    %233 = arith.mulf %231, %232 : vector<16x8xf32>
    %234 = vector.shape_cast %233 : vector<16x8xf32> to vector<2x8x8xf32>
    %235 = vector.extract_strided_slice %188 {offsets = [0, 48], sizes = [16, 8], strides = [1, 1]} : vector<16x96xf32> to vector<16x8xf32>
    %236 = vector.shape_cast %235 : vector<16x8xf32> to vector<2x8x8xf32>
    %237 = vector.extract_strided_slice %188 {offsets = [0, 80], sizes = [16, 8], strides = [1, 1]} : vector<16x96xf32> to vector<16x8xf32>
    %238 = vector.shape_cast %237 : vector<16x8xf32> to vector<2x8x8xf32>
    "tpu.trace_start"() <{level = 10 : i32, message = "bqd,bkd->bqk"}> : () -> ()
    %cst_88 = arith.constant dense<0.000000e+00> : vector<2x8x8xf32>
    %239 = tpu.matmul %234, %236, %cst_88 {dimension_numbers = #tpu.dot_dimension_numbers<[2], [2], [1], [1], [0, 0, 0, 1, 1, 1], [0], [0]>} : vector<2x8x8xf32>, vector<2x8x8xf32>, vector<2x8x8xf32> -> vector<2x8x8xf32>
    "tpu.trace_stop"() : () -> ()
    %cst_89 = arith.constant dense<0xFF800000> : vector<2x8xf32>
    %240 = vector.multi_reduction <maximumf>, %239, %cst_89 [2] : vector<2x8x8xf32> to vector<2x8xf32>
    %241 = vector.shape_cast %240 : vector<2x8xf32> to vector<2x8x1xf32>
    %242 = vector.broadcast %241 : vector<2x8x1xf32> to vector<2x8x8xf32>
    %243 = arith.subf %239, %242 : vector<2x8x8xf32>
    %244 = math.exp %243 : vector<2x8x8xf32>
    %cst_90 = arith.constant dense<0.000000e+00> : vector<2x8xf32>
    %245 = vector.multi_reduction <add>, %244, %cst_90 [2] : vector<2x8x8xf32> to vector<2x8xf32>
    %246 = vector.shape_cast %245 : vector<2x8xf32> to vector<2x8x1xf32>
    %247 = tpu.reciprocal %246 {approx = true} : vector<2x8x1xf32> -> vector<2x8x1xf32>
    %248 = vector.broadcast %247 : vector<2x8x1xf32> to vector<2x8x8xf32>
    %249 = arith.mulf %244, %248 : vector<2x8x8xf32>
    "tpu.trace_start"() <{level = 10 : i32, message = "bqk,bkd->bqd"}> : () -> ()
    %cst_91 = arith.constant dense<0.000000e+00> : vector<2x8x8xf32>
    %250 = tpu.matmul %249, %238, %cst_91 {dimension_numbers = #tpu.dot_dimension_numbers<[2], [1], [1], [2], [0, 0, 0, 1, 1, 2], [0], [0]>} : vector<2x8x8xf32>, vector<2x8x8xf32>, vector<2x8x8xf32> -> vector<2x8x8xf32>
    "tpu.trace_stop"() : () -> ()
    %251 = vector.shape_cast %250 : vector<2x8x8xf32> to vector<16x8xf32>
    %252 = vector.extract_strided_slice %188 {offsets = [0, 24], sizes = [16, 8], strides = [1, 1]} : vector<16x96xf32> to vector<16x8xf32>
    %cst_92 = arith.constant 0.353553385 : f32
    %253 = vector.broadcast %cst_92 : f32 to vector<16x8xf32>
    %254 = arith.mulf %252, %253 : vector<16x8xf32>
    %255 = vector.shape_cast %254 : vector<16x8xf32> to vector<2x8x8xf32>
    %256 = vector.extract_strided_slice %188 {offsets = [0, 56], sizes = [16, 8], strides = [1, 1]} : vector<16x96xf32> to vector<16x8xf32>
    %257 = vector.shape_cast %256 : vector<16x8xf32> to vector<2x8x8xf32>
    %258 = vector.extract_strided_slice %188 {offsets = [0, 88], sizes = [16, 8], strides = [1, 1]} : vector<16x96xf32> to vector<16x8xf32>
    %259 = vector.shape_cast %258 : vector<16x8xf32> to vector<2x8x8xf32>
    "tpu.trace_start"() <{level = 10 : i32, message = "bqd,bkd->bqk"}> : () -> ()
    %cst_93 = arith.constant dense<0.000000e+00> : vector<2x8x8xf32>
    %260 = tpu.matmul %255, %257, %cst_93 {dimension_numbers = #tpu.dot_dimension_numbers<[2], [2], [1], [1], [0, 0, 0, 1, 1, 1], [0], [0]>} : vector<2x8x8xf32>, vector<2x8x8xf32>, vector<2x8x8xf32> -> vector<2x8x8xf32>
    "tpu.trace_stop"() : () -> ()
    %cst_94 = arith.constant dense<0xFF800000> : vector<2x8xf32>
    %261 = vector.multi_reduction <maximumf>, %260, %cst_94 [2] : vector<2x8x8xf32> to vector<2x8xf32>
    %262 = vector.shape_cast %261 : vector<2x8xf32> to vector<2x8x1xf32>
    %263 = vector.broadcast %262 : vector<2x8x1xf32> to vector<2x8x8xf32>
    %264 = arith.subf %260, %263 : vector<2x8x8xf32>
    %265 = math.exp %264 : vector<2x8x8xf32>
    %cst_95 = arith.constant dense<0.000000e+00> : vector<2x8xf32>
    %266 = vector.multi_reduction <add>, %265, %cst_95 [2] : vector<2x8x8xf32> to vector<2x8xf32>
    %267 = vector.shape_cast %266 : vector<2x8xf32> to vector<2x8x1xf32>
    %268 = tpu.reciprocal %267 {approx = true} : vector<2x8x1xf32> -> vector<2x8x1xf32>
    %269 = vector.broadcast %268 : vector<2x8x1xf32> to vector<2x8x8xf32>
    %270 = arith.mulf %265, %269 : vector<2x8x8xf32>
    "tpu.trace_start"() <{level = 10 : i32, message = "bqk,bkd->bqd"}> : () -> ()
    %cst_96 = arith.constant dense<0.000000e+00> : vector<2x8x8xf32>
    %271 = tpu.matmul %270, %259, %cst_96 {dimension_numbers = #tpu.dot_dimension_numbers<[2], [1], [1], [2], [0, 0, 0, 1, 1, 2], [0], [0]>} : vector<2x8x8xf32>, vector<2x8x8xf32>, vector<2x8x8xf32> -> vector<2x8x8xf32>
    "tpu.trace_stop"() : () -> ()
    %272 = vector.shape_cast %271 : vector<2x8x8xf32> to vector<16x8xf32>
    %273 = tpu.concatenate %209, %230, %251, %272 in 1 : vector<16x8xf32>, vector<16x8xf32>, vector<16x8xf32>, vector<16x8xf32> -> vector<16x32xf32>
    %c1_97 = arith.constant 1 : index
    %c0_98 = arith.constant 0 : index
    %c0_99 = arith.constant 0 : index
    %274 = vector.load %arg4[%c1_97, %c0_98, %c0_99] : memref<2x32x32xf32, #tpu.memory_space<vmem>>, vector<1x32x32xf32>
    %275 = vector.shape_cast %274 : vector<1x32x32xf32> to vector<32x32xf32>
    %cst_100 = arith.constant dense<0.000000e+00> : vector<16x32xf32>
    %276 = tpu.matmul %273, %275, %cst_100 {dimension_numbers = #tpu.dot_dimension_numbers<[1], [0], [0], [1], [0, 0, 1, 1], [], []>} : vector<16x32xf32>, vector<32x32xf32>, vector<16x32xf32> -> vector<16x32xf32>
    %277 = arith.addf %276, %185 : vector<16x32xf32>
    %c1_101 = arith.constant 1 : index
    %c0_102 = arith.constant 0 : index
    %c0_103 = arith.constant 0 : index
    %278 = vector.load %arg5[%c1_101, %c0_102, %c0_103] : memref<2x1x32xf32, #tpu.memory_space<vmem>>, vector<1x1x32xf32>
    %279 = vector.shape_cast %278 : vector<1x1x32xf32> to vector<1x32xf32>
    %c1_104 = arith.constant 1 : index
    %c0_105 = arith.constant 0 : index
    %c0_106 = arith.constant 0 : index
    %280 = vector.load %arg6[%c1_104, %c0_105, %c0_106] : memref<2x1x32xf32, #tpu.memory_space<vmem>>, vector<1x1x32xf32>
    %281 = vector.shape_cast %280 : vector<1x1x32xf32> to vector<1x32xf32>
    %cst_107 = arith.constant dense<0.000000e+00> : vector<16xf32>
    %282 = vector.multi_reduction <add>, %277, %cst_107 [1] : vector<16x32xf32> to vector<16xf32>
    %283 = vector.shape_cast %282 : vector<16xf32> to vector<16x1xf32>
    %cst_108 = arith.constant 3.200000e+01 : f32
    %284 = vector.broadcast %cst_108 : f32 to vector<16x1xf32>
    %285 = arith.divf %283, %284 : vector<16x1xf32>
    %286 = vector.broadcast %285 : vector<16x1xf32> to vector<16x32xf32>
    %287 = arith.subf %277, %286 : vector<16x32xf32>
    %288 = arith.mulf %287, %287 : vector<16x32xf32>
    %cst_109 = arith.constant dense<0.000000e+00> : vector<16xf32>
    %289 = vector.multi_reduction <add>, %288, %cst_109 [1] : vector<16x32xf32> to vector<16xf32>
    %290 = vector.shape_cast %289 : vector<16xf32> to vector<16x1xf32>
    %cst_110 = arith.constant 3.200000e+01 : f32
    %291 = vector.broadcast %cst_110 : f32 to vector<16x1xf32>
    %292 = arith.divf %290, %291 : vector<16x1xf32>
    %293 = vector.broadcast %285 : vector<16x1xf32> to vector<16x32xf32>
    %294 = arith.subf %277, %293 : vector<16x32xf32>
    %cst_111 = arith.constant 9.99999997E-7 : f32
    %295 = vector.broadcast %cst_111 : f32 to vector<16x1xf32>
    %296 = arith.addf %292, %295 : vector<16x1xf32>
    %297 = math.rsqrt %296 : vector<16x1xf32>
    %298 = vector.broadcast %297 : vector<16x1xf32> to vector<16x32xf32>
    %299 = arith.mulf %294, %298 : vector<16x32xf32>
    %300 = vector.broadcast %279 : vector<1x32xf32> to vector<16x32xf32>
    %301 = arith.mulf %299, %300 : vector<16x32xf32>
    %302 = vector.broadcast %281 : vector<1x32xf32> to vector<16x32xf32>
    %303 = arith.addf %301, %302 : vector<16x32xf32>
    %c1_112 = arith.constant 1 : index
    %c0_113 = arith.constant 0 : index
    %c0_114 = arith.constant 0 : index
    %304 = vector.load %arg7[%c1_112, %c0_113, %c0_114] : memref<2x32x64xf32, #tpu.memory_space<vmem>>, vector<1x32x64xf32>
    %305 = vector.shape_cast %304 : vector<1x32x64xf32> to vector<32x64xf32>
    %cst_115 = arith.constant dense<0.000000e+00> : vector<16x64xf32>
    %306 = tpu.matmul %303, %305, %cst_115 {dimension_numbers = #tpu.dot_dimension_numbers<[1], [0], [0], [1], [0, 0, 1, 1], [], []>} : vector<16x32xf32>, vector<32x64xf32>, vector<16x64xf32> -> vector<16x64xf32>
    %c1_116 = arith.constant 1 : index
    %c0_117 = arith.constant 0 : index
    %c0_118 = arith.constant 0 : index
    %307 = vector.load %arg8[%c1_116, %c0_117, %c0_118] : memref<2x1x64xf32, #tpu.memory_space<vmem>>, vector<1x1x64xf32>
    %308 = vector.shape_cast %307 : vector<1x1x64xf32> to vector<1x64xf32>
    %309 = vector.broadcast %308 : vector<1x64xf32> to vector<16x64xf32>
    %310 = arith.addf %306, %309 : vector<16x64xf32>
    %cst_119 = arith.constant 0.000000e+00 : f32
    %311 = vector.broadcast %cst_119 : f32 to vector<16x64xf32>
    %312 = arith.maximumf %310, %311 : vector<16x64xf32>
    %c1_120 = arith.constant 1 : index
    %c0_121 = arith.constant 0 : index
    %c0_122 = arith.constant 0 : index
    %313 = vector.load %arg9[%c1_120, %c0_121, %c0_122] : memref<2x64x32xf32, #tpu.memory_space<vmem>>, vector<1x64x32xf32>
    %314 = vector.shape_cast %313 : vector<1x64x32xf32> to vector<64x32xf32>
    %cst_123 = arith.constant dense<0.000000e+00> : vector<16x32xf32>
    %315 = tpu.matmul %312, %314, %cst_123 {dimension_numbers = #tpu.dot_dimension_numbers<[1], [0], [0], [1], [0, 0, 1, 1], [], []>} : vector<16x64xf32>, vector<64x32xf32>, vector<16x32xf32> -> vector<16x32xf32>
    %c1_124 = arith.constant 1 : index
    %c0_125 = arith.constant 0 : index
    %c0_126 = arith.constant 0 : index
    %316 = vector.load %arg10[%c1_124, %c0_125, %c0_126] : memref<2x1x32xf32, #tpu.memory_space<vmem>>, vector<1x1x32xf32>
    %317 = vector.shape_cast %316 : vector<1x1x32xf32> to vector<1x32xf32>
    %318 = vector.broadcast %317 : vector<1x32xf32> to vector<16x32xf32>
    %319 = arith.addf %315, %318 : vector<16x32xf32>
    %320 = arith.addf %319, %303 : vector<16x32xf32>
    %c1_127 = arith.constant 1 : index
    %c0_128 = arith.constant 0 : index
    %c0_129 = arith.constant 0 : index
    %321 = vector.load %arg11[%c1_127, %c0_128, %c0_129] : memref<2x1x32xf32, #tpu.memory_space<vmem>>, vector<1x1x32xf32>
    %322 = vector.shape_cast %321 : vector<1x1x32xf32> to vector<1x32xf32>
    %c1_130 = arith.constant 1 : index
    %c0_131 = arith.constant 0 : index
    %c0_132 = arith.constant 0 : index
    %323 = vector.load %arg12[%c1_130, %c0_131, %c0_132] : memref<2x1x32xf32, #tpu.memory_space<vmem>>, vector<1x1x32xf32>
    %324 = vector.shape_cast %323 : vector<1x1x32xf32> to vector<1x32xf32>
    %cst_133 = arith.constant dense<0.000000e+00> : vector<16xf32>
    %325 = vector.multi_reduction <add>, %320, %cst_133 [1] : vector<16x32xf32> to vector<16xf32>
    %326 = vector.shape_cast %325 : vector<16xf32> to vector<16x1xf32>
    %cst_134 = arith.constant 3.200000e+01 : f32
    %327 = vector.broadcast %cst_134 : f32 to vector<16x1xf32>
    %328 = arith.divf %326, %327 : vector<16x1xf32>
    %329 = vector.broadcast %328 : vector<16x1xf32> to vector<16x32xf32>
    %330 = arith.subf %320, %329 : vector<16x32xf32>
    %331 = arith.mulf %330, %330 : vector<16x32xf32>
    %cst_135 = arith.constant dense<0.000000e+00> : vector<16xf32>
    %332 = vector.multi_reduction <add>, %331, %cst_135 [1] : vector<16x32xf32> to vector<16xf32>
    %333 = vector.shape_cast %332 : vector<16xf32> to vector<16x1xf32>
    %cst_136 = arith.constant 3.200000e+01 : f32
    %334 = vector.broadcast %cst_136 : f32 to vector<16x1xf32>
    %335 = arith.divf %333, %334 : vector<16x1xf32>
    %336 = vector.broadcast %328 : vector<16x1xf32> to vector<16x32xf32>
    %337 = arith.subf %320, %336 : vector<16x32xf32>
    %cst_137 = arith.constant 9.99999997E-7 : f32
    %338 = vector.broadcast %cst_137 : f32 to vector<16x1xf32>
    %339 = arith.addf %335, %338 : vector<16x1xf32>
    %340 = math.rsqrt %339 : vector<16x1xf32>
    %341 = vector.broadcast %340 : vector<16x1xf32> to vector<16x32xf32>
    %342 = arith.mulf %337, %341 : vector<16x32xf32>
    %343 = vector.broadcast %322 : vector<1x32xf32> to vector<16x32xf32>
    %344 = arith.mulf %342, %343 : vector<16x32xf32>
    %345 = vector.broadcast %324 : vector<1x32xf32> to vector<16x32xf32>
    %346 = arith.addf %344, %345 : vector<16x32xf32>
    %347 = vector.extract_strided_slice %346 {offsets = [7, 0], sizes = [1, 32], strides = [1, 1]} : vector<16x32xf32> to vector<1x32xf32>
    %348 = vector.extract_strided_slice %346 {offsets = [15, 0], sizes = [1, 32], strides = [1, 1]} : vector<16x32xf32> to vector<1x32xf32>
    %349 = tpu.concatenate %347, %348 in 0 : vector<1x32xf32>, vector<1x32xf32> -> vector<2x32xf32>
    %c0_138 = arith.constant 0 : index
    %c0_139 = arith.constant 0 : index
    %350 = vector.load %arg13[%c0_138, %c0_139] : memref<32x28xf32, #tpu.memory_space<vmem>>, vector<32x28xf32>
    %cst_140 = arith.constant dense<0.000000e+00> : vector<2x28xf32>
    %351 = tpu.matmul %349, %350, %cst_140 {dimension_numbers = #tpu.dot_dimension_numbers<[1], [0], [0], [1], [0, 0, 1, 1], [], []>} : vector<2x32xf32>, vector<32x28xf32>, vector<2x28xf32> -> vector<2x28xf32>
    %cst_141 = arith.constant 0.176776692 : f32
    %352 = vector.broadcast %cst_141 : f32 to vector<2x28xf32>
    %353 = arith.mulf %351, %352 : vector<2x28xf32>
    %c0_142 = arith.constant 0 : index
    %c0_143 = arith.constant 0 : index
    %354 = vector.load %arg14[%c0_142, %c0_143] : memref<2x28xf32, #tpu.memory_space<vmem>>, vector<2x28xf32>
    tpu.vector_store %arg14[%c0_142, %c0_143], %353 {strides = array<i32>} : memref<2x28xf32, #tpu.memory_space<vmem>>, vector<2x28xf32>,
    return
  }
}

</mosaic_0001>

<llo_original>
// kernel: tpu_custom_call.1
$region0: #{tpu_custom_call.1}
  #allocation0 [shape = 'u32[]', space=smem, size = 0x4, offset = 0x4, fixed_abs, tag = 'smem constant byte address 0x4 - core index']
  #allocation1 [shape = 'u32[72,128]{1,0:T(1,128)}', space=vmem, size = 0x9000, scoped, tag = 'internal scratch']
  %s0 = inlined_call_operand.hbm [shape: f32[16,32], index: 0, kind: input, shape index: {}]
  %s1 = inlined_call_operand.hbm [shape: f32[1,32], index: 1, kind: input, shape index: {}]
  %s2 = inlined_call_operand.hbm [shape: f32[1,32], index: 2, kind: input, shape index: {}]
  %s3 = inlined_call_operand.vmem [shape: f32[2,32,96], index: 3, kind: input, shape index: {}]
  %s4 = inlined_call_operand.vmem [shape: f32[2,32,32], index: 4, kind: input, shape index: {}]
  %s5 = inlined_call_operand.vmem [shape: f32[2,1,32], index: 5, kind: input, shape index: {}]
  %s6 = inlined_call_operand.vmem [shape: f32[2,1,32], index: 6, kind: input, shape index: {}]
  %s7 = inlined_call_operand.vmem [shape: f32[2,32,64], index: 7, kind: input, shape index: {}]
  %s8 = inlined_call_operand.hbm [shape: f32[2,1,64], index: 8, kind: input, shape index: {}]
  %s9 = inlined_call_operand.vmem [shape: f32[2,64,32], index: 9, kind: input, shape index: {}]
  %s10 = inlined_call_operand.vmem [shape: f32[2,1,32], index: 10, kind: input, shape index: {}]
  %s11 = inlined_call_operand.vmem [shape: f32[2,1,32], index: 11, kind: input, shape index: {}]
  %s12 = inlined_call_operand.vmem [shape: f32[2,1,32], index: 12, kind: input, shape index: {}]
  %s13 = inlined_call_operand.hbm [shape: f32[32,28], index: 13, kind: input, shape index: {}]
  %s14 = inlined_call_operand.hbm [shape: f32[2,28], index: 14, kind: output, shape index: {}]
  %s15 = sld [smem:[#allocation0]]
  $region86: #{tpu_custom_call.1} parent=0
    _
  %s17 = ssub.s32 1, %s15
  %s18 = scalar_select 0, %s17, %s15
  $region1: #{tpu_custom_call.1} parent=0
    #allocation2 [shape = 'u8[8192]{0}', space=vmem, size = 0x2000, scoped, tag = 'input window, operand 0, single buffered']
    #allocation3 [shape = 's32[1]{0}', space=sflag, size = 0x4, scoped, tag = 'scoped memory for tpu_custom_call.1']
    #allocation4 [shape = 's32[1]{0}', space=sflag, size = 0x4, scoped, tag = 'scoped memory for tpu_custom_call.1']
    #allocation5 [shape = 'u8[512]{0}', space=vmem, size = 0x400, scoped, tag = 'input window, operand 1, single buffered']
    #allocation6 [shape = 's32[1]{0}', space=sflag, size = 0x4, scoped, tag = 'scoped memory for tpu_custom_call.1']
    #allocation7 [shape = 'u8[512]{0}', space=vmem, size = 0x400, scoped, tag = 'input window, operand 2, single buffered']
    #allocation8 [shape = 'u8[1024]{0}', space=vmem, size = 0x400, scoped, tag = 'input window, operand 8, single buffered']
    #allocation9 [shape = 's32[1]{0}', space=sflag, size = 0x4, scoped, tag = 'scoped memory for tpu_custom_call.1']
    #allocation10 [shape = 'u8[16384]{0}', space=vmem, size = 0x4000, scoped, tag = 'input window, operand 13, single buffered']
    #allocation11 [shape = 'u8[1024]{0}', space=vmem, size = 0x400, scoped, tag = 'output window, operand 0, single buffered']
    %19 = vsyncpa [#allocation3], 0
    %20 = vsyncpa [#allocation6], 0
    %21 = vsyncpa [#allocation9], 0
    %22 = vsyncpa [#allocation4], 0
    // Predicated region
    $region2: #{tpu_custom_call.1} parent=1 // pred_check
      _
    $region3: #{tpu_custom_call.1} parent=1 // pred_check_branch
      %24 = sbr.rel (0) target = $region5
    $region4: #{tpu_custom_call.1} parent=1 // pred_region
      %26 = vsyncadd [#allocation3], 0
      %s27 = sshll.u32 %s0, 4
      %s28 = int_to_ptr.hbm [resolvable:$true] %s27
      %s29 = sshll.u32 [#allocation2], 4
      %s30 = int_to_ptr.vmem [resolvable:$true] %s29
      %35 = dma.hbm_to_vmem [thread:$0]  %s28, 256, %s30, [#allocation3], 128, 128, 8
    $region5: #{tpu_custom_call.1} parent=1 // pred_fallthru
      _
    // Predicated region
    $region6: #{tpu_custom_call.1} parent=1 // pred_check
      _
    $region7: #{tpu_custom_call.1} parent=1 // pred_check_branch
      %37 = sbr.rel (0) target = $region9
    $region8: #{tpu_custom_call.1} parent=1 // pred_region
      %39 = vsyncadd [#allocation6], 0
      %s41 = sshll.u32 %s1, 4
      %s42 = int_to_ptr.hbm [resolvable:$true] %s41
      %s43 = sshll.u32 [#allocation5], 4
      %s44 = int_to_ptr.vmem [resolvable:$true] %s43
      %46 = dma.hbm_to_vmem [thread:$0]  %s42, 16, %s44, [#allocation6]
    $region9: #{tpu_custom_call.1} parent=1 // pred_fallthru
      _
    // Predicated region
    $region10: #{tpu_custom_call.1} parent=1 // pred_check
      _
    $region11: #{tpu_custom_call.1} parent=1 // pred_check_branch
      %48 = sbr.rel (0) target = $region13
    $region12: #{tpu_custom_call.1} parent=1 // pred_region
      %50 = vsyncadd [#allocation6], 0
      %s52 = sshll.u32 %s2, 4
      %s53 = int_to_ptr.hbm [resolvable:$true] %s52
      %s54 = sshll.u32 [#allocation7], 4
      %s55 = int_to_ptr.vmem [resolvable:$true] %s54
      %57 = dma.hbm_to_vmem [thread:$0]  %s53, 16, %s55, [#allocation6]
    $region13: #{tpu_custom_call.1} parent=1 // pred_fallthru
      _
    // Predicated region
    $region14: #{tpu_custom_call.1} parent=1 // pred_check
      _
    $region15: #{tpu_custom_call.1} parent=1 // pred_check_branch
      %59 = sbr.rel (0) target = $region17
    $region16: #{tpu_custom_call.1} parent=1 // pred_region
      _
    $region17: #{tpu_custom_call.1} parent=1 // pred_fallthru
      _
    // Predicated region
    $region18: #{tpu_custom_call.1} parent=1 // pred_check
      _
    $region19: #{tpu_custom_call.1} parent=1 // pred_check_branch
      %61 = sbr.rel (0) target = $region21
    $region20: #{tpu_custom_call.1} parent=1 // pred_region
      _
    $region21: #{tpu_custom_call.1} parent=1 // pred_fallthru
      _
    // Predicated region
    $region22: #{tpu_custom_call.1} parent=1 // pred_check
      _
    $region23: #{tpu_custom_call.1} parent=1 // pred_check_branch
      %63 = sbr.rel (0) target = $region25
    $region24: #{tpu_custom_call.1} parent=1 // pred_region
      _
    $region25: #{tpu_custom_call.1} parent=1 // pred_fallthru
      _
    // Predicated region
    $region26: #{tpu_custom_call.1} parent=1 // pred_check
      _
    $region27: #{tpu_custom_call.1} parent=1 // pred_check_branch
      %65 = sbr.rel (0) target = $region29
    $region28: #{tpu_custom_call.1} parent=1 // pred_region
      _
    $region29: #{tpu_custom_call.1} parent=1 // pred_fallthru
      _
    // Predicated region
    $region30: #{tpu_custom_call.1} parent=1 // pred_check
      _
    $region31: #{tpu_custom_call.1} parent=1 // pred_check_branch
      %67 = sbr.rel (0) target = $region33
    $region32: #{tpu_custom_call.1} parent=1 // pred_region
      _
    $region33: #{tpu_custom_call.1} parent=1 // pred_fallthru
      _
    // Predicated region
    $region34: #{tpu_custom_call.1} parent=1 // pred_check
      _
    $region35: #{tpu_custom_call.1} parent=1 // pred_check_branch
      %69 = sbr.rel (0) target = $region37
    $region36: #{tpu_custom_call.1} parent=1 // pred_region
      %71 = vsyncadd [#allocation9], 0
      %s72 = sshll.u32 %s8, 4
      %s73 = int_to_ptr.hbm [resolvable:$true] %s72
      %s74 = sshll.u32 [#allocation8], 4
      %s75 = int_to_ptr.vmem [resolvable:$true] %s74
      %80 = dma.hbm_to_vmem [thread:$0]  %s73, 32, %s75, [#allocation9], 16, 16, 1
    $region37: #{tpu_custom_call.1} parent=1 // pred_fallthru
      _
    // Predicated region
    $region38: #{tpu_custom_call.1} parent=1 // pred_check
      _
    $region39: #{tpu_custom_call.1} parent=1 // pred_check_branch
      %82 = sbr.rel (0) target = $region41
    $region40: #{tpu_custom_call.1} parent=1 // pred_region
      _
    $region41: #{tpu_custom_call.1} parent=1 // pred_fallthru
      _
    // Predicated region
    $region42: #{tpu_custom_call.1} parent=1 // pred_check
      _
    $region43: #{tpu_custom_call.1} parent=1 // pred_check_branch
      %84 = sbr.rel (0) target = $region45
    $region44: #{tpu_custom_call.1} parent=1 // pred_region
      _
    $region45: #{tpu_custom_call.1} parent=1 // pred_fallthru
      _
    // Predicated region
    $region46: #{tpu_custom_call.1} parent=1 // pred_check
      _
    $region47: #{tpu_custom_call.1} parent=1 // pred_check_branch
      %86 = sbr.rel (0) target = $region49
    $region48: #{tpu_custom_call.1} parent=1 // pred_region
      _
    $region49: #{tpu_custom_call.1} parent=1 // pred_fallthru
      _
    // Predicated region
    $region50: #{tpu_custom_call.1} parent=1 // pred_check
      _
    $region51: #{tpu_custom_call.1} parent=1 // pred_check_branch
      %88 = sbr.rel (0) target = $region53
    $region52: #{tpu_custom_call.1} parent=1 // pred_region
      _
    $region53: #{tpu_custom_call.1} parent=1 // pred_fallthru
      _
    // Predicated region
    $region54: #{tpu_custom_call.1} parent=1 // pred_check
      _
    $region55: #{tpu_custom_call.1} parent=1 // pred_check_branch
      %90 = sbr.rel (0) target = $region57
    $region56: #{tpu_custom_call.1} parent=1 // pred_region
      %92 = vsyncadd [#allocation9], 0
      %s93 = sshll.u32 %s13, 4
      %s94 = int_to_ptr.hbm [resolvable:$true] %s93
      %s95 = sshll.u32 [#allocation10], 4
      %s96 = int_to_ptr.vmem [resolvable:$true] %s95
      %101 = dma.hbm_to_vmem [thread:$0]  %s94, 512, %s96, [#allocation9], 128, 128, 8
    $region57: #{tpu_custom_call.1} parent=1 // pred_fallthru
      _
    // Predicated region
    $region58: #{tpu_custom_call.1} parent=1 // pred_check
      _
    $region59: #{tpu_custom_call.1} parent=1 // pred_check_branch
      %103 = sbr.rel (0) target = $region61
    $region60: #{tpu_custom_call.1} parent=1 // pred_region
      %105 = dma.done [#allocation3], 256
    $region61: #{tpu_custom_call.1} parent=1 // pred_fallthru
      _
    // Predicated region
    $region62: #{tpu_custom_call.1} parent=1 // pred_check
      _
    $region63: #{tpu_custom_call.1} parent=1 // pred_check_branch
      %107 = sbr.rel (0) target = $region65
    $region64: #{tpu_custom_call.1} parent=1 // pred_region
      %109 = dma.done [#allocation6], 16
    $region65: #{tpu_custom_call.1} parent=1 // pred_fallthru
      _
    // Predicated region
    $region66: #{tpu_custom_call.1} parent=1 // pred_check
      _
    $region67: #{tpu_custom_call.1} parent=1 // pred_check_branch
      %111 = sbr.rel (0) target = $region69
    $region68: #{tpu_custom_call.1} parent=1 // pred_region
      %113 = dma.done [#allocation6], 16
    $region69: #{tpu_custom_call.1} parent=1 // pred_fallthru
      _
    // Predicated region
    $region70: #{tpu_custom_call.1} parent=1 // pred_check
      _
    $region71: #{tpu_custom_call.1} parent=1 // pred_check_branch
      %115 = sbr.rel (0) target = $region73
    $region72: #{tpu_custom_call.1} parent=1 // pred_region
      %117 = dma.done [#allocation9], 32
    $region73: #{tpu_custom_call.1} parent=1 // pred_fallthru
      _
    // Predicated region
    $region74: #{tpu_custom_call.1} parent=1 // pred_check
      _
    $region75: #{tpu_custom_call.1} parent=1 // pred_check_branch
      %119 = sbr.rel (0) target = $region77
    $region76: #{tpu_custom_call.1} parent=1 // pred_region
      %121 = dma.done [#allocation9], 512
    $region77: #{tpu_custom_call.1} parent=1 // pred_fallthru
      _
    %v122 = vld [vmem:[#allocation2] sm:$0xff]
    %v123 = vld [vmem:[#allocation2 + $0x8] sm:$0xff]
    %v124 = vld [vmem:[#allocation5] sm:$0x1]
    %v125 = vld [vmem:[#allocation7] sm:$0x1]
    %vm126 = vcmask 261120
    %v127 = vsel %vm126, %v122, 0.0
    %128 = vadd.xlane.f32.xlu0 %v127
    %v129 = vpop.xlane.xlu0 %128
    %v130 = vsel %vm126, %v123, 0.0
    %131 = vadd.xlane.f32.xlu0 %v130
    %v132 = vpop.xlane.xlu0 %131
    %v133 = vrcp.pop 32.0
    %v134 = vmul.f32 32.0, %v133
    %v135 = vsub.f32 1.0, %v134
    %v136 = vmul.f32 %v133, %v135
    %v137 = vadd.f32 %v133, %v136
    %vm138 = vweird.f32 %v133
    %v139 = vsel %vm138, %v133, %v137
    %v140 = vmul.f32 %v129, %v139
    %v141 = vmul.f32 %v132, %v139
    %v142 = vsub.f32 %v122, %v140
    %v143 = vsub.f32 %v123, %v141
    %v144 = vmul.f32 %v142, %v142
    %v145 = vmul.f32 %v143, %v143
    %v146 = vsel %vm126, %v144, 0.0
    %147 = vadd.xlane.f32.xlu0 %v146
    %v148 = vpop.xlane.xlu0 %147
    %v149 = vsel %vm126, %v145, 0.0
    %150 = vadd.xlane.f32.xlu0 %v149
    %v151 = vpop.xlane.xlu0 %150
    %v152 = vmul.f32 %v148, %v139
    %v153 = vmul.f32 %v151, %v139
    %v154 = vadd.f32 %v152, 1e-06
    %v155 = vadd.f32 %v153, 1e-06
    %v156 = vrsqrt.pop %v154
    %v157 = vmul.f32 %v156, %v154
    %v158 = vmul.f32 %v157, %v156
    %v159 = vmul.f32 0.5, %v158
    %v160 = vsub.f32 1.5, %v159
    %v161 = vmul.f32 %v156, %v160
    %vm162 = vweird.f32 %v154
    %vm163 = vweird.f32 %v156
    %vm164 = vmor %vm162, %vm163
    %v165 = vsel %vm164, %v156, %v161
    %v166 = vrsqrt.pop %v155
    %v167 = vmul.f32 %v166, %v155
    %v168 = vmul.f32 %v167, %v166
    %v169 = vmul.f32 0.5, %v168
    %v170 = vsub.f32 1.5, %v169
    %v171 = vmul.f32 %v166, %v170
    %vm172 = vweird.f32 %v155
    %vm173 = vweird.f32 %v166
    %vm174 = vmor %vm172, %vm173
    %v175 = vsel %vm174, %v166, %v171
    %v176 = vmul.f32 %v142, %v165
    %v177 = vmul.f32 %v143, %v175
    %v179 = vperm.slane %v124, 0
    %v181 = vmul.f32 %v176, %v179
    %v182 = vmul.f32 %v177, %v179
    %v184 = vperm.slane %v125, 0
    %v186 = vadd.f32 %v181, %v184
    %v187 = vadd.f32 %v182, %v184
    %v188 = vld [vmem:[%s3] sm:$0xff]
    %v189 = vld [vmem:[%s3 + $0x8] sm:$0xff]
    %v190 = vld [vmem:[%s3 + $0x10] sm:$0xff]
    %v191 = vld [vmem:[%s3 + $0x18] sm:$0xff]
    %v193 = vsel %vm126, %v186, 0
    %v196 = vsel %vm126, %v187, 0
    %198 = vmatpush.msra.mxu0 0.0
    %199 = vmatpush.msra.mxu0 0.0
    %200 = vmatpush.msra.mxu0 0.0
    %201 = vmatpush.msra.mxu0 0.0
    %202 = vmatpush.msra.mxu0 0.0
    %203 = vmatpush.msra.mxu0 0.0
    %204 = vmatpush.msra.mxu0 0.0
    %205 = vmatpush.msra.mxu0 0.0
    %206 = vmatpush.msra.mxu0 0.0
    %207 = vmatpush.msra.mxu0 0.0
    %208 = vmatpush.msra.mxu0 0.0
    %209 = vmatpush.msra.mxu0 0.0
    %210 = vmatpush.msra.mxu0 %v191
    %211 = vmatpush.msra.mxu0 %v190
    %212 = vmatpush.msra.mxu0 %v189
    %213 = vmatpush.msra.mxu0 %v188
    %214 = vmatmul.f32.gmra.mxu0 %v193
    %v215 = vpop.f32.mrf.mxu0
    %v216 = vadd.f32 0.0, %v215
    %217 = vmatmul.f32.gmra.mxu0 %v196
    %v218 = vpop.f32.mrf.mxu0
    %v219 = vadd.f32 0.0, %v218
    %220 = vdwg.mxu0
    %v221 = vmul.f32 %v216, 0.35355338
    %v222 = vmul.f32 %v219, 0.35355338
    %224 = vrot.lane.b32.xlu0 %v216, 96
    %v225 = vpop.permute.xlu0 %224
    %vm226 = vcmask 64512
    %v228 = vsel %vm226, %v221, 0
    %v230 = vsel %vm226, %v225, 0
    %232 = vmatpush.xpose.msra.mxu0 0.0
    %233 = vmatpush.xpose.msra.mxu0 0.0
    %234 = vmatpush.xpose.msra.mxu0 0.0
    %235 = vmatpush.xpose.msra.mxu0 0.0
    %236 = vmatpush.xpose.msra.mxu0 0.0
    %237 = vmatpush.xpose.msra.mxu0 0.0
    %238 = vmatpush.xpose.msra.mxu0 0.0
    %239 = vmatpush.xpose.msra.mxu0 0.0
    %240 = vmatpush.xpose.msra.mxu0 0.0
    %241 = vmatpush.xpose.msra.mxu0 0.0
    %242 = vmatpush.xpose.msra.mxu0 0.0
    %243 = vmatpush.xpose.msra.mxu0 0.0
    %244 = vmatpush.xpose.msra.mxu0 0.0
    %245 = vmatpush.xpose.msra.mxu0 0.0
    %246 = vmatpush.xpose.msra.mxu0 0.0
    %247 = vmatpush.xpose.msra.mxu0 %v230
    %248 = vmatmul.f32.gmra.mxu0 %v228
    %v249 = vpop.f32.mrf.mxu0
    %v250 = vadd.f32 0.0, %v249
    %251 = vdwg.mxu0
    %253 = vrot.lane.b32.xlu0 %v219, 96
    %v254 = vpop.permute.xlu0 %253
    %v256 = vsel %vm226, %v222, 0
    %v258 = vsel %vm226, %v254, 0
    %260 = vmatpush.xpose.msra.mxu0 0.0
    %261 = vmatpush.xpose.msra.mxu0 0.0
    %262 = vmatpush.xpose.msra.mxu0 0.0
    %263 = vmatpush.xpose.msra.mxu0 0.0
    %264 = vmatpush.xpose.msra.mxu0 0.0
    %265 = vmatpush.xpose.msra.mxu0 0.0
    %266 = vmatpush.xpose.msra.mxu0 0.0
    %267 = vmatpush.xpose.msra.mxu0 0.0
    %268 = vmatpush.xpose.msra.mxu0 0.0
    %269 = vmatpush.xpose.msra.mxu0 0.0
    %270 = vmatpush.xpose.msra.mxu0 0.0
    %271 = vmatpush.xpose.msra.mxu0 0.0
    %272 = vmatpush.xpose.msra.mxu0 0.0
    %273 = vmatpush.xpose.msra.mxu0 0.0
    %274 = vmatpush.xpose.msra.mxu0 0.0
    %275 = vmatpush.xpose.msra.mxu0 %v258
    %276 = vmatmul.f32.gmra.mxu0 %v256
    %v277 = vpop.f32.mrf.mxu0
    %v278 = vadd.f32 0.0, %v277
    %279 = vdwg.mxu0
    %v280 = vsel %vm226, %v250, -inf
    %281 = vmax.xlane.f32.xlu0 %v280
    %v282 = vpop.xlane.xlu0 %281
    %v283 = vsel %vm226, %v278, -inf
    %284 = vmax.xlane.f32.xlu0 %v283
    %v285 = vpop.xlane.xlu0 %284
    %v286 = vsub.f32 %v250, %v282
    %v287 = vsub.f32 %v278, %v285
    %v288 = vmul.f32 %v286, 1.442695
    %v289 = vpow.pop %v288
    %v290 = vmul.f32 %v287, 1.442695
    %v291 = vpow.pop %v290
    %v292 = vsel %vm226, %v289, 0.0
    %293 = vadd.xlane.f32.xlu0 %v292
    %v294 = vpop.xlane.xlu0 %293
    %v295 = vsel %vm226, %v291, 0.0
    %296 = vadd.xlane.f32.xlu0 %v295
    %v297 = vpop.xlane.xlu0 %296
    %v298 = vrcp.pop %v294
    %v299 = vrcp.pop %v297
    %v300 = vmul.f32 %v289, %v298
    %v301 = vmul.f32 %v291, %v299
    %302 = vrot.lane.b32.xlu0 %v216, 64
    %v303 = vpop.permute.xlu0 %302
    %v306 = vsel %vm226, %v300, 0
    %308 = vmatpush.msra.mxu0 0.0
    %309 = vmatpush.msra.mxu0 0.0
    %310 = vmatpush.msra.mxu0 0.0
    %311 = vmatpush.msra.mxu0 0.0
    %312 = vmatpush.msra.mxu0 0.0
    %313 = vmatpush.msra.mxu0 0.0
    %314 = vmatpush.msra.mxu0 0.0
    %315 = vmatpush.msra.mxu0 0.0
    %316 = vmatpush.msra.mxu0 0.0
    %317 = vmatpush.msra.mxu0 0.0
    %318 = vmatpush.msra.mxu0 0.0
    %319 = vmatpush.msra.mxu0 0.0
    %320 = vmatpush.msra.mxu0 0.0
    %321 = vmatpush.msra.mxu0 0.0
    %322 = vmatpush.msra.mxu0 0.0
    %323 = vmatpush.msra.mxu0 %v303
    %324 = vmatmul.f32.gmra.mxu0 %v306
    %v325 = vpop.f32.mrf.mxu0
    %v326 = vadd.f32 0.0, %v325
    %327 = vdwg.mxu0
    %328 = vrot.lane.b32.xlu0 %v219, 64
    %v329 = vpop.permute.xlu0 %328
    %v332 = vsel %vm226, %v301, 0
    %334 = vmatpush.msra.mxu0 0.0
    %335 = vmatpush.msra.mxu0 0.0
    %336 = vmatpush.msra.mxu0 0.0
    %337 = vmatpush.msra.mxu0 0.0
    %338 = vmatpush.msra.mxu0 0.0
    %339 = vmatpush.msra.mxu0 0.0
    %340 = vmatpush.msra.mxu0 0.0
    %341 = vmatpush.msra.mxu0 0.0
    %342 = vmatpush.msra.mxu0 0.0
    %343 = vmatpush.msra.mxu0 0.0
    %344 = vmatpush.msra.mxu0 0.0
    %345 = vmatpush.msra.mxu0 0.0
    %346 = vmatpush.msra.mxu0 0.0
    %347 = vmatpush.msra.mxu0 0.0
    %348 = vmatpush.msra.mxu0 0.0
    %349 = vmatpush.msra.mxu0 %v329
    %350 = vmatmul.f32.gmra.mxu0 %v332
    %v351 = vpop.f32.mrf.mxu0
    %v352 = vadd.f32 0.0, %v351
    %353 = vdwg.mxu0
    %354 = vrot.lane.b32.xlu0 %v221, 120
    %v355 = vpop.permute.xlu0 %354
    %356 = vrot.lane.b32.xlu0 %v216, 88
    %v357 = vpop.permute.xlu0 %356
    %v358 = vsel %vm226, %v355, 0
    %v360 = vsel %vm226, %v357, 0
    %362 = vmatpush.xpose.msra.mxu0 0.0
    %363 = vmatpush.xpose.msra.mxu0 0.0
    %364 = vmatpush.xpose.msra.mxu0 0.0
    %365 = vmatpush.xpose.msra.mxu0 0.0
    %366 = vmatpush.xpose.msra.mxu0 0.0
    %367 = vmatpush.xpose.msra.mxu0 0.0
    %368 = vmatpush.xpose.msra.mxu0 0.0
    %369 = vmatpush.xpose.msra.mxu0 0.0
    %370 = vmatpush.xpose.msra.mxu0 0.0
    %371 = vmatpush.xpose.msra.mxu0 0.0
    %372 = vmatpush.xpose.msra.mxu0 0.0
    %373 = vmatpush.xpose.msra.mxu0 0.0
    %374 = vmatpush.xpose.msra.mxu0 0.0
    %375 = vmatpush.xpose.msra.mxu0 0.0
    %376 = vmatpush.xpose.msra.mxu0 0.0
    %377 = vmatpush.xpose.msra.mxu0 %v360
    %378 = vmatmul.f32.gmra.mxu0 %v358
    %v379 = vpop.f32.mrf.mxu0
    %v380 = vadd.f32 0.0, %v379
    %381 = vdwg.mxu0
    %382 = vrot.lane.b32.xlu0 %v222, 120
    %v383 = vpop.permute.xlu0 %382
    %384 = vrot.lane.b32.xlu0 %v219, 88
    %v385 = vpop.permute.xlu0 %384
    %v386 = vsel %vm226, %v383, 0
    %v388 = vsel %vm226, %v385, 0
    %390 = vmatpush.xpose.msra.mxu0 0.0
    %391 = vmatpush.xpose.msra.mxu0 0.0
    %392 = vmatpush.xpose.msra.mxu0 0.0
    %393 = vmatpush.xpose.msra.mxu0 0.0
    %394 = vmatpush.xpose.msra.mxu0 0.0
    %395 = vmatpush.xpose.msra.mxu0 0.0
    %396 = vmatpush.xpose.msra.mxu0 0.0
    %397 = vmatpush.xpose.msra.mxu0 0.0
    %398 = vmatpush.xpose.msra.mxu0 0.0
    %399 = vmatpush.xpose.msra.mxu0 0.0
    %400 = vmatpush.xpose.msra.mxu0 0.0
    %401 = vmatpush.xpose.msra.mxu0 0.0
    %402 = vmatpush.xpose.msra.mxu0 0.0
    %403 = vmatpush.xpose.msra.mxu0 0.0
    %404 = vmatpush.xpose.msra.mxu0 0.0
    %405 = vmatpush.xpose.msra.mxu0 %v388
    %406 = vmatmul.f32.gmra.mxu0 %v386
    %v407 = vpop.f32.mrf.mxu0
    %v408 = vadd.f32 0.0, %v407
    %409 = vdwg.mxu0
    %v410 = vsel %vm226, %v380, -inf
    %411 = vmax.xlane.f32.xlu0 %v410
    %v412 = vpop.xlane.xlu0 %411
    %v413 = vsel %vm226, %v408, -inf
    %414 = vmax.xlane.f32.xlu0 %v413
    %v415 = vpop.xlane.xlu0 %414
    %v416 = vsub.f32 %v380, %v412
    %v417 = vsub.f32 %v408, %v415
    %v418 = vmul.f32 %v416, 1.442695
    %v419 = vpow.pop %v418
    %v420 = vmul.f32 %v417, 1.442695
    %v421 = vpow.pop %v420
    %v422 = vsel %vm226, %v419, 0.0
    %423 = vadd.xlane.f32.xlu0 %v422
    %v424 = vpop.xlane.xlu0 %423
    %v425 = vsel %vm226, %v421, 0.0
    %426 = vadd.xlane.f32.xlu0 %v425
    %v427 = vpop.xlane.xlu0 %426
    %v428 = vrcp.pop %v424
    %v429 = vrcp.pop %v427
    %v430 = vmul.f32 %v419, %v428
    %v431 = vmul.f32 %v421, %v429
    %432 = vrot.lane.b32.xlu0 %v216, 56
    %v433 = vpop.permute.xlu0 %432
    %v436 = vsel %vm226, %v430, 0
    %438 = vmatpush.msra.mxu0 0.0
    %439 = vmatpush.msra.mxu0 0.0
    %440 = vmatpush.msra.mxu0 0.0
    %441 = vmatpush.msra.mxu0 0.0
    %442 = vmatpush.msra.mxu0 0.0
    %443 = vmatpush.msra.mxu0 0.0
    %444 = vmatpush.msra.mxu0 0.0
    %445 = vmatpush.msra.mxu0 0.0
    %446 = vmatpush.msra.mxu0 0.0
    %447 = vmatpush.msra.mxu0 0.0
    %448 = vmatpush.msra.mxu0 0.0
    %449 = vmatpush.msra.mxu0 0.0
    %450 = vmatpush.msra.mxu0 0.0
    %451 = vmatpush.msra.mxu0 0.0
    %452 = vmatpush.msra.mxu0 0.0
    %453 = vmatpush.msra.mxu0 %v433
    %454 = vmatmul.f32.gmra.mxu0 %v436
    %v455 = vpop.f32.mrf.mxu0
    %v456 = vadd.f32 0.0, %v455
    %457 = vdwg.mxu0
    %458 = vrot.lane.b32.xlu0 %v219, 56
    %v459 = vpop.permute.xlu0 %458
    %v462 = vsel %vm226, %v431, 0
    %464 = vmatpush.msra.mxu0 0.0
    %465 = vmatpush.msra.mxu0 0.0
    %466 = vmatpush.msra.mxu0 0.0
    %467 = vmatpush.msra.mxu0 0.0
    %468 = vmatpush.msra.mxu0 0.0
    %469 = vmatpush.msra.mxu0 0.0
    %470 = vmatpush.msra.mxu0 0.0
    %471 = vmatpush.msra.mxu0 0.0
    %472 = vmatpush.msra.mxu0 0.0
    %473 = vmatpush.msra.mxu0 0.0
    %474 = vmatpush.msra.mxu0 0.0
    %475 = vmatpush.msra.mxu0 0.0
    %476 = vmatpush.msra.mxu0 0.0
    %477 = vmatpush.msra.mxu0 0.0
    %478 = vmatpush.msra.mxu0 0.0
    %479 = vmatpush.msra.mxu0 %v459
    %480 = vmatmul.f32.gmra.mxu0 %v462
    %v481 = vpop.f32.mrf.mxu0
    %v482 = vadd.f32 0.0, %v481
    %483 = vdwg.mxu0
    %484 = vrot.lane.b32.xlu0 %v221, 112
    %v485 = vpop.permute.xlu0 %484
    %486 = vrot.lane.b32.xlu0 %v216, 80
    %v487 = vpop.permute.xlu0 %486
    %v488 = vsel %vm226, %v485, 0
    %v490 = vsel %vm226, %v487, 0
    %492 = vmatpush.xpose.msra.mxu0 0.0
    %493 = vmatpush.xpose.msra.mxu0 0.0
    %494 = vmatpush.xpose.msra.mxu0 0.0
    %495 = vmatpush.xpose.msra.mxu0 0.0
    %496 = vmatpush.xpose.msra.mxu0 0.0
    %497 = vmatpush.xpose.msra.mxu0 0.0
    %498 = vmatpush.xpose.msra.mxu0 0.0
    %499 = vmatpush.xpose.msra.mxu0 0.0
    %500 = vmatpush.xpose.msra.mxu0 0.0
    %501 = vmatpush.xpose.msra.mxu0 0.0
    %502 = vmatpush.xpose.msra.mxu0 0.0
    %503 = vmatpush.xpose.msra.mxu0 0.0
    %504 = vmatpush.xpose.msra.mxu0 0.0
    %505 = vmatpush.xpose.msra.mxu0 0.0
    %506 = vmatpush.xpose.msra.mxu0 0.0
    %507 = vmatpush.xpose.msra.mxu0 %v490
    %508 = vmatmul.f32.gmra.mxu0 %v488
    %v509 = vpop.f32.mrf.mxu0
    %v510 = vadd.f32 0.0, %v509
    %511 = vdwg.mxu0
    %512 = vrot.lane.b32.xlu0 %v222, 112
    %v513 = vpop.permute.xlu0 %512
    %514 = vrot.lane.b32.xlu0 %v219, 80
    %v515 = vpop.permute.xlu0 %514
    %v516 = vsel %vm226, %v513, 0
    %v518 = vsel %vm226, %v515, 0
    %520 = vmatpush.xpose.msra.mxu0 0.0
    %521 = vmatpush.xpose.msra.mxu0 0.0
    %522 = vmatpush.xpose.msra.mxu0 0.0
    %523 = vmatpush.xpose.msra.mxu0 0.0
    %524 = vmatpush.xpose.msra.mxu0 0.0
    %525 = vmatpush.xpose.msra.mxu0 0.0
    %526 = vmatpush.xpose.msra.mxu0 0.0
    %527 = vmatpush.xpose.msra.mxu0 0.0
    %528 = vmatpush.xpose.msra.mxu0 0.0
    %529 = vmatpush.xpose.msra.mxu0 0.0
    %530 = vmatpush.xpose.msra.mxu0 0.0
    %531 = vmatpush.xpose.msra.mxu0 0.0
    %532 = vmatpush.xpose.msra.mxu0 0.0
    %533 = vmatpush.xpose.msra.mxu0 0.0
    %534 = vmatpush.xpose.msra.mxu0 0.0
    %535 = vmatpush.xpose.msra.mxu0 %v518
    %536 = vmatmul.f32.gmra.mxu0 %v516
    %v537 = vpop.f32.mrf.mxu0
    %v538 = vadd.f32 0.0, %v537
    %539 = vdwg.mxu0
    %v540 = vsel %vm226, %v510, -inf
    %541 = vmax.xlane.f32.xlu0 %v540
    %v542 = vpop.xlane.xlu0 %541
    %v543 = vsel %vm226, %v538, -inf
    %544 = vmax.xlane.f32.xlu0 %v543
    %v545 = vpop.xlane.xlu0 %544
    %v546 = vsub.f32 %v510, %v542
    %v547 = vsub.f32 %v538, %v545
    %v548 = vmul.f32 %v546, 1.442695
    %v549 = vpow.pop %v548
    %v550 = vmul.f32 %v547, 1.442695
    %v551 = vpow.pop %v550
    %v552 = vsel %vm226, %v549, 0.0
    %553 = vadd.xlane.f32.xlu0 %v552
    %v554 = vpop.xlane.xlu0 %553
    %v555 = vsel %vm226, %v551, 0.0
    %556 = vadd.xlane.f32.xlu0 %v555
    %v557 = vpop.xlane.xlu0 %556
    %v558 = vrcp.pop %v554
    %v559 = vrcp.pop %v557
    %v560 = vmul.f32 %v549, %v558
    %v561 = vmul.f32 %v551, %v559
    %562 = vrot.lane.b32.xlu0 %v216, 48
    %v563 = vpop.permute.xlu0 %562
    %v566 = vsel %vm226, %v560, 0
    %568 = vmatpush.msra.mxu0 0.0
    %569 = vmatpush.msra.mxu0 0.0
    %570 = vmatpush.msra.mxu0 0.0
    %571 = vmatpush.msra.mxu0 0.0
    %572 = vmatpush.msra.mxu0 0.0
    %573 = vmatpush.msra.mxu0 0.0
    %574 = vmatpush.msra.mxu0 0.0
    %575 = vmatpush.msra.mxu0 0.0
    %576 = vmatpush.msra.mxu0 0.0
    %577 = vmatpush.msra.mxu0 0.0
    %578 = vmatpush.msra.mxu0 0.0
    %579 = vmatpush.msra.mxu0 0.0
    %580 = vmatpush.msra.mxu0 0.0
    %581 = vmatpush.msra.mxu0 0.0
    %582 = vmatpush.msra.mxu0 0.0
    %583 = vmatpush.msra.mxu0 %v563
    %584 = vmatmul.f32.gmra.mxu0 %v566
    %v585 = vpop.f32.mrf.mxu0
    %v586 = vadd.f32 0.0, %v585
    %587 = vdwg.mxu0
    %588 = vrot.lane.b32.xlu0 %v219, 48
    %v589 = vpop.permute.xlu0 %588
    %v592 = vsel %vm226, %v561, 0
    %594 = vmatpush.msra.mxu0 0.0
    %595 = vmatpush.msra.mxu0 0.0
    %596 = vmatpush.msra.mxu0 0.0
    %597 = vmatpush.msra.mxu0 0.0
    %598 = vmatpush.msra.mxu0 0.0
    %599 = vmatpush.msra.mxu0 0.0
    %600 = vmatpush.msra.mxu0 0.0
    %601 = vmatpush.msra.mxu0 0.0
    %602 = vmatpush.msra.mxu0 0.0
    %603 = vmatpush.msra.mxu0 0.0
    %604 = vmatpush.msra.mxu0 0.0
    %605 = vmatpush.msra.mxu0 0.0
    %606 = vmatpush.msra.mxu0 0.0
    %607 = vmatpush.msra.mxu0 0.0
    %608 = vmatpush.msra.mxu0 0.0
    %609 = vmatpush.msra.mxu0 %v589
    %610 = vmatmul.f32.gmra.mxu0 %v592
    %v611 = vpop.f32.mrf.mxu0
    %v612 = vadd.f32 0.0, %v611
    %613 = vdwg.mxu0
    %614 = vrot.lane.b32.xlu0 %v221, 104
    %v615 = vpop.permute.xlu0 %614
    %616 = vrot.lane.b32.xlu0 %v216, 72
    %v617 = vpop.permute.xlu0 %616
    %v618 = vsel %vm226, %v615, 0
    %v620 = vsel %vm226, %v617, 0
    %622 = vmatpush.xpose.msra.mxu0 0.0
    %623 = vmatpush.xpose.msra.mxu0 0.0
    %624 = vmatpush.xpose.msra.mxu0 0.0
    %625 = vmatpush.xpose.msra.mxu0 0.0
    %626 = vmatpush.xpose.msra.mxu0 0.0
    %627 = vmatpush.xpose.msra.mxu0 0.0
    %628 = vmatpush.xpose.msra.mxu0 0.0
    %629 = vmatpush.xpose.msra.mxu0 0.0
    %630 = vmatpush.xpose.msra.mxu0 0.0
    %631 = vmatpush.xpose.msra.mxu0 0.0
    %632 = vmatpush.xpose.msra.mxu0 0.0
    %633 = vmatpush.xpose.msra.mxu0 0.0
    %634 = vmatpush.xpose.msra.mxu0 0.0
    %635 = vmatpush.xpose.msra.mxu0 0.0
    %636 = vmatpush.xpose.msra.mxu0 0.0
    %637 = vmatpush.xpose.msra.mxu0 %v620
    %638 = vmatmul.f32.gmra.mxu0 %v618
    %v639 = vpop.f32.mrf.mxu0
    %v640 = vadd.f32 0.0, %v639
    %641 = vdwg.mxu0
    %642 = vrot.lane.b32.xlu0 %v222, 104
    %v643 = vpop.permute.xlu0 %642
    %644 = vrot.lane.b32.xlu0 %v219, 72
    %v645 = vpop.permute.xlu0 %644
    %v646 = vsel %vm226, %v643, 0
    %v648 = vsel %vm226, %v645, 0
    %650 = vmatpush.xpose.msra.mxu0 0.0
    %651 = vmatpush.xpose.msra.mxu0 0.0
    %652 = vmatpush.xpose.msra.mxu0 0.0
    %653 = vmatpush.xpose.msra.mxu0 0.0
    %654 = vmatpush.xpose.msra.mxu0 0.0
    %655 = vmatpush.xpose.msra.mxu0 0.0
    %656 = vmatpush.xpose.msra.mxu0 0.0
    %657 = vmatpush.xpose.msra.mxu0 0.0
    %658 = vmatpush.xpose.msra.mxu0 0.0
    %659 = vmatpush.xpose.msra.mxu0 0.0
    %660 = vmatpush.xpose.msra.mxu0 0.0
    %661 = vmatpush.xpose.msra.mxu0 0.0
    %662 = vmatpush.xpose.msra.mxu0 0.0
    %663 = vmatpush.xpose.msra.mxu0 0.0
    %664 = vmatpush.xpose.msra.mxu0 0.0
    %665 = vmatpush.xpose.msra.mxu0 %v648
    %666 = vmatmul.f32.gmra.mxu0 %v646
    %v667 = vpop.f32.mrf.mxu0
    %v668 = vadd.f32 0.0, %v667
    %669 = vdwg.mxu0
    %v670 = vsel %vm226, %v640, -inf
    %671 = vmax.xlane.f32.xlu0 %v670
    %v672 = vpop.xlane.xlu0 %671
    %v673 = vsel %vm226, %v668, -inf
    %674 = vmax.xlane.f32.xlu0 %v673
    %v675 = vpop.xlane.xlu0 %674
    %v676 = vsub.f32 %v640, %v672
    %v677 = vsub.f32 %v668, %v675
    %v678 = vmul.f32 %v676, 1.442695
    %v679 = vpow.pop %v678
    %v680 = vmul.f32 %v677, 1.442695
    %v681 = vpow.pop %v680
    %v682 = vsel %vm226, %v679, 0.0
    %683 = vadd.xlane.f32.xlu0 %v682
    %v684 = vpop.xlane.xlu0 %683
    %v685 = vsel %vm226, %v681, 0.0
    %686 = vadd.xlane.f32.xlu0 %v685
    %v687 = vpop.xlane.xlu0 %686
    %v688 = vrcp.pop %v684
    %v689 = vrcp.pop %v687
    %v690 = vmul.f32 %v679, %v688
    %v691 = vmul.f32 %v681, %v689
    %692 = vrot.lane.b32.xlu0 %v216, 40
    %v693 = vpop.permute.xlu0 %692
    %v696 = vsel %vm226, %v690, 0
    %698 = vmatpush.msra.mxu0 0.0
    %699 = vmatpush.msra.mxu0 0.0
    %700 = vmatpush.msra.mxu0 0.0
    %701 = vmatpush.msra.mxu0 0.0
    %702 = vmatpush.msra.mxu0 0.0
    %703 = vmatpush.msra.mxu0 0.0
    %704 = vmatpush.msra.mxu0 0.0
    %705 = vmatpush.msra.mxu0 0.0
    %706 = vmatpush.msra.mxu0 0.0
    %707 = vmatpush.msra.mxu0 0.0
    %708 = vmatpush.msra.mxu0 0.0
    %709 = vmatpush.msra.mxu0 0.0
    %710 = vmatpush.msra.mxu0 0.0
    %711 = vmatpush.msra.mxu0 0.0
    %712 = vmatpush.msra.mxu0 0.0
    %713 = vmatpush.msra.mxu0 %v693
    %714 = vmatmul.f32.gmra.mxu0 %v696
    %v715 = vpop.f32.mrf.mxu0
    %v716 = vadd.f32 0.0, %v715
    %717 = vdwg.mxu0
    %718 = vrot.lane.b32.xlu0 %v219, 40
    %v719 = vpop.permute.xlu0 %718
    %v722 = vsel %vm226, %v691, 0
    %724 = vmatpush.msra.mxu0 0.0
    %725 = vmatpush.msra.mxu0 0.0
    %726 = vmatpush.msra.mxu0 0.0
    %727 = vmatpush.msra.mxu0 0.0
    %728 = vmatpush.msra.mxu0 0.0
    %729 = vmatpush.msra.mxu0 0.0
    %730 = vmatpush.msra.mxu0 0.0
    %731 = vmatpush.msra.mxu0 0.0
    %732 = vmatpush.msra.mxu0 0.0
    %733 = vmatpush.msra.mxu0 0.0
    %734 = vmatpush.msra.mxu0 0.0
    %735 = vmatpush.msra.mxu0 0.0
    %736 = vmatpush.msra.mxu0 0.0
    %737 = vmatpush.msra.mxu0 0.0
    %738 = vmatpush.msra.mxu0 0.0
    %739 = vmatpush.msra.mxu0 %v719
    %740 = vmatmul.f32.gmra.mxu0 %v722
    %v741 = vpop.f32.mrf.mxu0
    %v742 = vadd.f32 0.0, %v741
    %743 = vdwg.mxu0
    %746 = vrot.lane.b32.xlu0 %v456, 8
    %v747 = vpop.permute.xlu0 %746
    %748 = vrot.lane.b32.xlu0 %v482, 8
    %v749 = vpop.permute.xlu0 %748
    %754 = vrot.lane.b32.xlu0 %v586, 16
    %v755 = vpop.permute.xlu0 %754
    %756 = vrot.lane.b32.xlu0 %v612, 16
    %v757 = vpop.permute.xlu0 %756
    %762 = vrot.lane.b32.xlu0 %v716, 24
    %v763 = vpop.permute.xlu0 %762
    %764 = vrot.lane.b32.xlu0 %v742, 24
    %v765 = vpop.permute.xlu0 %764
    %v768 = vsel %vm226, %v326, %v747
    %v769 = vsel %vm226, %v352, %v749
    %vm770 = vcmask 130048
    %v771 = vsel %vm770, %v768, %v755
    %v772 = vsel %vm770, %v769, %v757
    %vm773 = vcmask 195584
    %v774 = vsel %vm773, %v771, %v763
    %v775 = vsel %vm773, %v772, %v765
    %v776 = vld [vmem:[%s4] sm:$0xff]
    %v777 = vld [vmem:[%s4 + $0x8] sm:$0xff]
    %v778 = vld [vmem:[%s4 + $0x10] sm:$0xff]
    %v779 = vld [vmem:[%s4 + $0x18] sm:$0xff]
    %v781 = vsel %vm126, %v774, 0
    %v784 = vsel %vm126, %v775, 0
    %786 = vmatpush.msra.mxu0 0.0
    %787 = vmatpush.msra.mxu0 0.0
    %788 = vmatpush.msra.mxu0 0.0
    %789 = vmatpush.msra.mxu0 0.0
    %790 = vmatpush.msra.mxu0 0.0
    %791 = vmatpush.msra.mxu0 0.0
    %792 = vmatpush.msra.mxu0 0.0
    %793 = vmatpush.msra.mxu0 0.0
    %794 = vmatpush.msra.mxu0 0.0
    %795 = vmatpush.msra.mxu0 0.0
    %796 = vmatpush.msra.mxu0 0.0
    %797 = vmatpush.msra.mxu0 0.0
    %798 = vmatpush.msra.mxu0 %v779
    %799 = vmatpush.msra.mxu0 %v778
    %800 = vmatpush.msra.mxu0 %v777
    %801 = vmatpush.msra.mxu0 %v776
    %802 = vmatmul.f32.gmra.mxu0 %v781
    %v803 = vpop.f32.mrf.mxu0
    %v804 = vadd.f32 %v186, %v803
    %805 = vmatmul.f32.gmra.mxu0 %v784
    %v806 = vpop.f32.mrf.mxu0
    %v807 = vadd.f32 %v187, %v806
    %808 = vdwg.mxu0
    %v809 = vld [vmem:[%s5] sm:$0x1]
    %v810 = vld [vmem:[%s6] sm:$0x1]
    %v811 = vsel %vm126, %v804, 0.0
    %812 = vadd.xlane.f32.xlu0 %v811
    %v813 = vpop.xlane.xlu0 %812
    %v814 = vsel %vm126, %v807, 0.0
    %815 = vadd.xlane.f32.xlu0 %v814
    %v816 = vpop.xlane.xlu0 %815
    %v817 = vmul.f32 %v813, %v139
    %v818 = vmul.f32 %v816, %v139
    %v819 = vsub.f32 %v804, %v817
    %v820 = vsub.f32 %v807, %v818
    %v821 = vmul.f32 %v819, %v819
    %v822 = vmul.f32 %v820, %v820
    %v823 = vsel %vm126, %v821, 0.0
    %824 = vadd.xlane.f32.xlu0 %v823
    %v825 = vpop.xlane.xlu0 %824
    %v826 = vsel %vm126, %v822, 0.0
    %827 = vadd.xlane.f32.xlu0 %v826
    %v828 = vpop.xlane.xlu0 %827
    %v829 = vmul.f32 %v825, %v139
    %v830 = vmul.f32 %v828, %v139
    %v831 = vadd.f32 %v829, 1e-06
    %v832 = vadd.f32 %v830, 1e-06
    %v833 = vrsqrt.pop %v831
    %v834 = vmul.f32 %v833, %v831
    %v835 = vmul.f32 %v834, %v833
    %v836 = vmul.f32 0.5, %v835
    %v837 = vsub.f32 1.5, %v836
    %v838 = vmul.f32 %v833, %v837
    %vm839 = vweird.f32 %v831
    %vm840 = vweird.f32 %v833
    %vm841 = vmor %vm839, %vm840
    %v842 = vsel %vm841, %v833, %v838
    %v843 = vrsqrt.pop %v832
    %v844 = vmul.f32 %v843, %v832
    %v845 = vmul.f32 %v844, %v843
    %v846 = vmul.f32 0.5, %v845
    %v847 = vsub.f32 1.5, %v846
    %v848 = vmul.f32 %v843, %v847
    %vm849 = vweird.f32 %v832
    %vm850 = vweird.f32 %v843
    %vm851 = vmor %vm849, %vm850
    %v852 = vsel %vm851, %v843, %v848
    %v853 = vmul.f32 %v819, %v842
    %v854 = vmul.f32 %v820, %v852
    %v856 = vperm.slane %v809, 0
    %v858 = vmul.f32 %v853, %v856
    %v859 = vmul.f32 %v854, %v856
    %v861 = vperm.slane %v810, 0
    %v863 = vadd.f32 %v858, %v861
    %v864 = vadd.f32 %v859, %v861
    %v865 = vld [vmem:[%s7] sm:$0xff]
    %v866 = vld [vmem:[%s7 + $0x8] sm:$0xff]
    %v867 = vld [vmem:[%s7 + $0x10] sm:$0xff]
    %v868 = vld [vmem:[%s7 + $0x18] sm:$0xff]
    %v869 = vld [vmem:[#allocation8] sm:$0x1]
    %v871 = vperm.slane %v869, 0
    %v874 = vsel %vm126, %v863, 0
    %v877 = vsel %vm126, %v864, 0
    %879 = vmatpush.msra.mxu0 0.0
    %880 = vmatpush.msra.mxu0 0.0
    %881 = vmatpush.msra.mxu0 0.0
    %882 = vmatpush.msra.mxu0 0.0
    %883 = vmatpush.msra.mxu0 0.0
    %884 = vmatpush.msra.mxu0 0.0
    %885 = vmatpush.msra.mxu0 0.0
    %886 = vmatpush.msra.mxu0 0.0
    %887 = vmatpush.msra.mxu0 0.0
    %888 = vmatpush.msra.mxu0 0.0
    %889 = vmatpush.msra.mxu0 0.0
    %890 = vmatpush.msra.mxu0 0.0
    %891 = vmatpush.msra.mxu0 %v868
    %892 = vmatpush.msra.mxu0 %v867
    %893 = vmatpush.msra.mxu0 %v866
    %894 = vmatpush.msra.mxu0 %v865
    %895 = vmatmul.f32.gmra.mxu0 %v874
    %v896 = vpop.f32.mrf.mxu0
    %v897 = vadd.f32 %v871, %v896
    %898 = vmatmul.f32.gmra.mxu0 %v877
    %v899 = vpop.f32.mrf.mxu0
    %v900 = vadd.f32 %v871, %v899
    %901 = vdwg.mxu0
    %v902 = vmax.f32 %v897, 0.0
    %v903 = vmax.f32 %v900, 0.0
    %v904 = vld [vmem:[%s9] sm:$0xff]
    %v905 = vld [vmem:[%s9 + $0x8] sm:$0xff]
    %v906 = vld [vmem:[%s9 + $0x10] sm:$0xff]
    %v907 = vld [vmem:[%s9 + $0x18] sm:$0xff]
    %v908 = vld [vmem:[%s9 + $0x20] sm:$0xff]
    %v909 = vld [vmem:[%s9 + $0x28] sm:$0xff]
    %v910 = vld [vmem:[%s9 + $0x30] sm:$0xff]
    %v911 = vld [vmem:[%s9 + $0x38] sm:$0xff]
    %v912 = vld [vmem:[%s10] sm:$0x1]
    %v914 = vperm.slane %v912, 0
    %vm916 = vcmask 523264
    %v918 = vsel %vm916, %v902, 0
    %v921 = vsel %vm916, %v903, 0
    %923 = vmatpush.msra.mxu0 0.0
    %924 = vmatpush.msra.mxu0 0.0
    %925 = vmatpush.msra.mxu0 0.0
    %926 = vmatpush.msra.mxu0 0.0
    %927 = vmatpush.msra.mxu0 0.0
    %928 = vmatpush.msra.mxu0 0.0
    %929 = vmatpush.msra.mxu0 0.0
    %930 = vmatpush.msra.mxu0 0.0
    %931 = vmatpush.msra.mxu0 %v911
    %932 = vmatpush.msra.mxu0 %v910
    %933 = vmatpush.msra.mxu0 %v909
    %934 = vmatpush.msra.mxu0 %v908
    %935 = vmatpush.msra.mxu0 %v907
    %936 = vmatpush.msra.mxu0 %v906
    %937 = vmatpush.msra.mxu0 %v905
    %938 = vmatpush.msra.mxu0 %v904
    %939 = vmatmul.f32.gmra.mxu0 %v918
    %v940 = vpop.f32.mrf.mxu0
    %v941 = vadd.f32 %v914, %v940
    %942 = vmatmul.f32.gmra.mxu0 %v921
    %v943 = vpop.f32.mrf.mxu0
    %v944 = vadd.f32 %v914, %v943
    %945 = vdwg.mxu0
    %v946 = vadd.f32 %v941, %v863
    %v947 = vadd.f32 %v944, %v864
    %v948 = vld [vmem:[%s11] sm:$0x1]
    %v949 = vld [vmem:[%s12] sm:$0x1]
    %v950 = vsel %vm126, %v946, 0.0
    %951 = vadd.xlane.f32.xlu0 %v950
    %v952 = vpop.xlane.xlu0 %951
    %v953 = vsel %vm126, %v947, 0.0
    %954 = vadd.xlane.f32.xlu0 %v953
    %v955 = vpop.xlane.xlu0 %954
    %v956 = vmul.f32 %v952, %v139
    %v957 = vmul.f32 %v955, %v139
    %v958 = vsub.f32 %v946, %v956
    %v959 = vsub.f32 %v947, %v957
    %v960 = vmul.f32 %v958, %v958
    %v961 = vmul.f32 %v959, %v959
    %v962 = vsel %vm126, %v960, 0.0
    %963 = vadd.xlane.f32.xlu0 %v962
    %v964 = vpop.xlane.xlu0 %963
    %v965 = vsel %vm126, %v961, 0.0
    %966 = vadd.xlane.f32.xlu0 %v965
    %v967 = vpop.xlane.xlu0 %966
    %v968 = vmul.f32 %v964, %v139
    %v969 = vmul.f32 %v967, %v139
    %v970 = vadd.f32 %v968, 1e-06
    %v971 = vadd.f32 %v969, 1e-06
    %v972 = vrsqrt.pop %v970
    %v973 = vmul.f32 %v972, %v970
    %v974 = vmul.f32 %v973, %v972
    %v975 = vmul.f32 0.5, %v974
    %v976 = vsub.f32 1.5, %v975
    %v977 = vmul.f32 %v972, %v976
    %vm978 = vweird.f32 %v970
    %vm979 = vweird.f32 %v972
    %vm980 = vmor %vm978, %vm979
    %v981 = vsel %vm980, %v972, %v977
    %v982 = vrsqrt.pop %v971
    %v983 = vmul.f32 %v982, %v971
    %v984 = vmul.f32 %v983, %v982
    %v985 = vmul.f32 0.5, %v984
    %v986 = vsub.f32 1.5, %v985
    %v987 = vmul.f32 %v982, %v986
    %vm988 = vweird.f32 %v971
    %vm989 = vweird.f32 %v982
    %vm990 = vmor %vm988, %vm989
    %v991 = vsel %vm990, %v982, %v987
    %v992 = vmul.f32 %v958, %v981
    %v993 = vmul.f32 %v959, %v991
    %v995 = vperm.slane %v948, 0
    %v997 = vmul.f32 %v992, %v995
    %v998 = vmul.f32 %v993, %v995
    %v1000 = vperm.slane %v949, 0
    %v1002 = vadd.f32 %v997, %v1000
    %v1003 = vadd.f32 %v998, %v1000
    %s1004 = scalar_lea.vmem %s3, 32
    %v1005 = vld [vmem:[%s1004] sm:$0xff]
    %v1006 = vld [vmem:[%s1004 + $0x8] sm:$0xff]
    %v1007 = vld [vmem:[%s1004 + $0x10] sm:$0xff]
    %v1008 = vld [vmem:[%s1004 + $0x18] sm:$0xff]
    %v1010 = vsel %vm126, %v1002, 0
    %v1013 = vsel %vm126, %v1003, 0
    %1015 = vmatpush.msra.mxu0 0.0
    %1016 = vmatpush.msra.mxu0 0.0
    %1017 = vmatpush.msra.mxu0 0.0
    %1018 = vmatpush.msra.mxu0 0.0
    %1019 = vmatpush.msra.mxu0 0.0
    %1020 = vmatpush.msra.mxu0 0.0
    %1021 = vmatpush.msra.mxu0 0.0
    %1022 = vmatpush.msra.mxu0 0.0
    %1023 = vmatpush.msra.mxu0 0.0
    %1024 = vmatpush.msra.mxu0 0.0
    %1025 = vmatpush.msra.mxu0 0.0
    %1026 = vmatpush.msra.mxu0 0.0
    %1027 = vmatpush.msra.mxu0 %v1008
    %1028 = vmatpush.msra.mxu0 %v1007
    %1029 = vmatpush.msra.mxu0 %v1006
    %1030 = vmatpush.msra.mxu0 %v1005
    %1031 = vmatmul.f32.gmra.mxu0 %v1010
    %v1032 = vpop.f32.mrf.mxu0
    %v1033 = vadd.f32 0.0, %v1032
    %1034 = vmatmul.f32.gmra.mxu0 %v1013
    %v1035 = vpop.f32.mrf.mxu0
    %v1036 = vadd.f32 0.0, %v1035
    %1037 = vdwg.mxu0
    %v1038 = vmul.f32 %v1033, 0.35355338
    %v1039 = vmul.f32 %v1036, 0.35355338
    %1041 = vrot.lane.b32.xlu0 %v1033, 96
    %v1042 = vpop.permute.xlu0 %1041
    %v1044 = vsel %vm226, %v1038, 0
    %v1046 = vsel %vm226, %v1042, 0
    %1048 = vmatpush.xpose.msra.mxu0 0.0
    %1049 = vmatpush.xpose.msra.mxu0 0.0
    %1050 = vmatpush.xpose.msra.mxu0 0.0
    %1051 = vmatpush.xpose.msra.mxu0 0.0
    %1052 = vmatpush.xpose.msra.mxu0 0.0
    %1053 = vmatpush.xpose.msra.mxu0 0.0
    %1054 = vmatpush.xpose.msra.mxu0 0.0
    %1055 = vmatpush.xpose.msra.mxu0 0.0
    %1056 = vmatpush.xpose.msra.mxu0 0.0
    %1057 = vmatpush.xpose.msra.mxu0 0.0
    %1058 = vmatpush.xpose.msra.mxu0 0.0
    %1059 = vmatpush.xpose.msra.mxu0 0.0
    %1060 = vmatpush.xpose.msra.mxu0 0.0
    %1061 = vmatpush.xpose.msra.mxu0 0.0
    %1062 = vmatpush.xpose.msra.mxu0 0.0
    %1063 = vmatpush.xpose.msra.mxu0 %v1046
    %1064 = vmatmul.f32.gmra.mxu0 %v1044
    %v1065 = vpop.f32.mrf.mxu0
    %v1066 = vadd.f32 0.0, %v1065
    %1067 = vdwg.mxu0
    %1069 = vrot.lane.b32.xlu0 %v1036, 96
    %v1070 = vpop.permute.xlu0 %1069
    %v1072 = vsel %vm226, %v1039, 0
    %v1074 = vsel %vm226, %v1070, 0
    %1076 = vmatpush.xpose.msra.mxu0 0.0
    %1077 = vmatpush.xpose.msra.mxu0 0.0
    %1078 = vmatpush.xpose.msra.mxu0 0.0
    %1079 = vmatpush.xpose.msra.mxu0 0.0
    %1080 = vmatpush.xpose.msra.mxu0 0.0
    %1081 = vmatpush.xpose.msra.mxu0 0.0
    %1082 = vmatpush.xpose.msra.mxu0 0.0
    %1083 = vmatpush.xpose.msra.mxu0 0.0
    %1084 = vmatpush.xpose.msra.mxu0 0.0
    %1085 = vmatpush.xpose.msra.mxu0 0.0
    %1086 = vmatpush.xpose.msra.mxu0 0.0
    %1087 = vmatpush.xpose.msra.mxu0 0.0
    %1088 = vmatpush.xpose.msra.mxu0 0.0
    %1089 = vmatpush.xpose.msra.mxu0 0.0
    %1090 = vmatpush.xpose.msra.mxu0 0.0
    %1091 = vmatpush.xpose.msra.mxu0 %v1074
    %1092 = vmatmul.f32.gmra.mxu0 %v1072
    %v1093 = vpop.f32.mrf.mxu0
    %v1094 = vadd.f32 0.0, %v1093
    %1095 = vdwg.mxu0
    %v1096 = vsel %vm226, %v1066, -inf
    %1097 = vmax.xlane.f32.xlu0 %v1096
    %v1098 = vpop.xlane.xlu0 %1097
    %v1099 = vsel %vm226, %v1094, -inf
    %1100 = vmax.xlane.f32.xlu0 %v1099
    %v1101 = vpop.xlane.xlu0 %1100
    %v1102 = vsub.f32 %v1066, %v1098
    %v1103 = vsub.f32 %v1094, %v1101
    %v1104 = vmul.f32 %v1102, 1.442695
    %v1105 = vpow.pop %v1104
    %v1106 = vmul.f32 %v1103, 1.442695
    %v1107 = vpow.pop %v1106
    %v1108 = vsel %vm226, %v1105, 0.0
    %1109 = vadd.xlane.f32.xlu0 %v1108
    %v1110 = vpop.xlane.xlu0 %1109
    %v1111 = vsel %vm226, %v1107, 0.0
    %1112 = vadd.xlane.f32.xlu0 %v1111
    %v1113 = vpop.xlane.xlu0 %1112
    %v1114 = vrcp.pop %v1110
    %v1115 = vrcp.pop %v1113
    %v1116 = vmul.f32 %v1105, %v1114
    %v1117 = vmul.f32 %v1107, %v1115
    %1118 = vrot.lane.b32.xlu0 %v1033, 64
    %v1119 = vpop.permute.xlu0 %1118
    %v1122 = vsel %vm226, %v1116, 0
    %1124 = vmatpush.msra.mxu0 0.0
    %1125 = vmatpush.msra.mxu0 0.0
    %1126 = vmatpush.msra.mxu0 0.0
    %1127 = vmatpush.msra.mxu0 0.0
    %1128 = vmatpush.msra.mxu0 0.0
    %1129 = vmatpush.msra.mxu0 0.0
    %1130 = vmatpush.msra.mxu0 0.0
    %1131 = vmatpush.msra.mxu0 0.0
    %1132 = vmatpush.msra.mxu0 0.0
    %1133 = vmatpush.msra.mxu0 0.0
    %1134 = vmatpush.msra.mxu0 0.0
    %1135 = vmatpush.msra.mxu0 0.0
    %1136 = vmatpush.msra.mxu0 0.0
    %1137 = vmatpush.msra.mxu0 0.0
    %1138 = vmatpush.msra.mxu0 0.0
    %1139 = vmatpush.msra.mxu0 %v1119
    %1140 = vmatmul.f32.gmra.mxu0 %v1122
    %v1141 = vpop.f32.mrf.mxu0
    %v1142 = vadd.f32 0.0, %v1141
    %1143 = vdwg.mxu0
    %1144 = vrot.lane.b32.xlu0 %v1036, 64
    %v1145 = vpop.permute.xlu0 %1144
    %v1148 = vsel %vm226, %v1117, 0
    %1150 = vmatpush.msra.mxu0 0.0
    %1151 = vmatpush.msra.mxu0 0.0
    %1152 = vmatpush.msra.mxu0 0.0
    %1153 = vmatpush.msra.mxu0 0.0
    %1154 = vmatpush.msra.mxu0 0.0
    %1155 = vmatpush.msra.mxu0 0.0
    %1156 = vmatpush.msra.mxu0 0.0
    %1157 = vmatpush.msra.mxu0 0.0
    %1158 = vmatpush.msra.mxu0 0.0
    %1159 = vmatpush.msra.mxu0 0.0
    %1160 = vmatpush.msra.mxu0 0.0
    %1161 = vmatpush.msra.mxu0 0.0
    %1162 = vmatpush.msra.mxu0 0.0
    %1163 = vmatpush.msra.mxu0 0.0
    %1164 = vmatpush.msra.mxu0 0.0
    %1165 = vmatpush.msra.mxu0 %v1145
    %1166 = vmatmul.f32.gmra.mxu0 %v1148
    %v1167 = vpop.f32.mrf.mxu0
    %v1168 = vadd.f32 0.0, %v1167
    %1169 = vdwg.mxu0
    %1170 = vrot.lane.b32.xlu0 %v1038, 120
    %v1171 = vpop.permute.xlu0 %1170
    %1172 = vrot.lane.b32.xlu0 %v1033, 88
    %v1173 = vpop.permute.xlu0 %1172
    %v1174 = vsel %vm226, %v1171, 0
    %v1176 = vsel %vm226, %v1173, 0
    %1178 = vmatpush.xpose.msra.mxu0 0.0
    %1179 = vmatpush.xpose.msra.mxu0 0.0
    %1180 = vmatpush.xpose.msra.mxu0 0.0
    %1181 = vmatpush.xpose.msra.mxu0 0.0
    %1182 = vmatpush.xpose.msra.mxu0 0.0
    %1183 = vmatpush.xpose.msra.mxu0 0.0
    %1184 = vmatpush.xpose.msra.mxu0 0.0
    %1185 = vmatpush.xpose.msra.mxu0 0.0
    %1186 = vmatpush.xpose.msra.mxu0 0.0
    %1187 = vmatpush.xpose.msra.mxu0 0.0
    %1188 = vmatpush.xpose.msra.mxu0 0.0
    %1189 = vmatpush.xpose.msra.mxu0 0.0
    %1190 = vmatpush.xpose.msra.mxu0 0.0
    %1191 = vmatpush.xpose.msra.mxu0 0.0
    %1192 = vmatpush.xpose.msra.mxu0 0.0
    %1193 = vmatpush.xpose.msra.mxu0 %v1176
    %1194 = vmatmul.f32.gmra.mxu0 %v1174
    %v1195 = vpop.f32.mrf.mxu0
    %v1196 = vadd.f32 0.0, %v1195
    %1197 = vdwg.mxu0
    %1198 = vrot.lane.b32.xlu0 %v1039, 120
    %v1199 = vpop.permute.xlu0 %1198
    %1200 = vrot.lane.b32.xlu0 %v1036, 88
    %v1201 = vpop.permute.xlu0 %1200
    %v1202 = vsel %vm226, %v1199, 0
    %v1204 = vsel %vm226, %v1201, 0
    %1206 = vmatpush.xpose.msra.mxu0 0.0
    %1207 = vmatpush.xpose.msra.mxu0 0.0
    %1208 = vmatpush.xpose.msra.mxu0 0.0
    %1209 = vmatpush.xpose.msra.mxu0 0.0
    %1210 = vmatpush.xpose.msra.mxu0 0.0
    %1211 = vmatpush.xpose.msra.mxu0 0.0
    %1212 = vmatpush.xpose.msra.mxu0 0.0
    %1213 = vmatpush.xpose.msra.mxu0 0.0
    %1214 = vmatpush.xpose.msra.mxu0 0.0
    %1215 = vmatpush.xpose.msra.mxu0 0.0
    %1216 = vmatpush.xpose.msra.mxu0 0.0
    %1217 = vmatpush.xpose.msra.mxu0 0.0
    %1218 = vmatpush.xpose.msra.mxu0 0.0
    %1219 = vmatpush.xpose.msra.mxu0 0.0
    %1220 = vmatpush.xpose.msra.mxu0 0.0
    %1221 = vmatpush.xpose.msra.mxu0 %v1204
    %1222 = vmatmul.f32.gmra.mxu0 %v1202
    %v1223 = vpop.f32.mrf.mxu0
    %v1224 = vadd.f32 0.0, %v1223
    %1225 = vdwg.mxu0
    %v1226 = vsel %vm226, %v1196, -inf
    %1227 = vmax.xlane.f32.xlu0 %v1226
    %v1228 = vpop.xlane.xlu0 %1227
    %v1229 = vsel %vm226, %v1224, -inf
    %1230 = vmax.xlane.f32.xlu0 %v1229
    %v1231 = vpop.xlane.xlu0 %1230
    %v1232 = vsub.f32 %v1196, %v1228
    %v1233 = vsub.f32 %v1224, %v1231
    %v1234 = vmul.f32 %v1232, 1.442695
    %v1235 = vpow.pop %v1234
    %v1236 = vmul.f32 %v1233, 1.442695
    %v1237 = vpow.pop %v1236
    %v1238 = vsel %vm226, %v1235, 0.0
    %1239 = vadd.xlane.f32.xlu0 %v1238
    %v1240 = vpop.xlane.xlu0 %1239
    %v1241 = vsel %vm226, %v1237, 0.0
    %1242 = vadd.xlane.f32.xlu0 %v1241
    %v1243 = vpop.xlane.xlu0 %1242
    %v1244 = vrcp.pop %v1240
    %v1245 = vrcp.pop %v1243
    %v1246 = vmul.f32 %v1235, %v1244
    %v1247 = vmul.f32 %v1237, %v1245
    %1248 = vrot.lane.b32.xlu0 %v1033, 56
    %v1249 = vpop.permute.xlu0 %1248
    %v1252 = vsel %vm226, %v1246, 0
    %1254 = vmatpush.msra.mxu0 0.0
    %1255 = vmatpush.msra.mxu0 0.0
    %1256 = vmatpush.msra.mxu0 0.0
    %1257 = vmatpush.msra.mxu0 0.0
    %1258 = vmatpush.msra.mxu0 0.0
    %1259 = vmatpush.msra.mxu0 0.0
    %1260 = vmatpush.msra.mxu0 0.0
    %1261 = vmatpush.msra.mxu0 0.0
    %1262 = vmatpush.msra.mxu0 0.0
    %1263 = vmatpush.msra.mxu0 0.0
    %1264 = vmatpush.msra.mxu0 0.0
    %1265 = vmatpush.msra.mxu0 0.0
    %1266 = vmatpush.msra.mxu0 0.0
    %1267 = vmatpush.msra.mxu0 0.0
    %1268 = vmatpush.msra.mxu0 0.0
    %1269 = vmatpush.msra.mxu0 %v1249
    %1270 = vmatmul.f32.gmra.mxu0 %v1252
    %v1271 = vpop.f32.mrf.mxu0
    %v1272 = vadd.f32 0.0, %v1271
    %1273 = vdwg.mxu0
    %1274 = vrot.lane.b32.xlu0 %v1036, 56
    %v1275 = vpop.permute.xlu0 %1274
    %v1278 = vsel %vm226, %v1247, 0
    %1280 = vmatpush.msra.mxu0 0.0
    %1281 = vmatpush.msra.mxu0 0.0
    %1282 = vmatpush.msra.mxu0 0.0
    %1283 = vmatpush.msra.mxu0 0.0
    %1284 = vmatpush.msra.mxu0 0.0
    %1285 = vmatpush.msra.mxu0 0.0
    %1286 = vmatpush.msra.mxu0 0.0
    %1287 = vmatpush.msra.mxu0 0.0
    %1288 = vmatpush.msra.mxu0 0.0
    %1289 = vmatpush.msra.mxu0 0.0
    %1290 = vmatpush.msra.mxu0 0.0
    %1291 = vmatpush.msra.mxu0 0.0
    %1292 = vmatpush.msra.mxu0 0.0
    %1293 = vmatpush.msra.mxu0 0.0
    %1294 = vmatpush.msra.mxu0 0.0
    %1295 = vmatpush.msra.mxu0 %v1275
    %1296 = vmatmul.f32.gmra.mxu0 %v1278
    %v1297 = vpop.f32.mrf.mxu0
    %v1298 = vadd.f32 0.0, %v1297
    %1299 = vdwg.mxu0
    %1300 = vrot.lane.b32.xlu0 %v1038, 112
    %v1301 = vpop.permute.xlu0 %1300
    %1302 = vrot.lane.b32.xlu0 %v1033, 80
    %v1303 = vpop.permute.xlu0 %1302
    %v1304 = vsel %vm226, %v1301, 0
    %v1306 = vsel %vm226, %v1303, 0
    %1308 = vmatpush.xpose.msra.mxu0 0.0
    %1309 = vmatpush.xpose.msra.mxu0 0.0
    %1310 = vmatpush.xpose.msra.mxu0 0.0
    %1311 = vmatpush.xpose.msra.mxu0 0.0
    %1312 = vmatpush.xpose.msra.mxu0 0.0
    %1313 = vmatpush.xpose.msra.mxu0 0.0
    %1314 = vmatpush.xpose.msra.mxu0 0.0
    %1315 = vmatpush.xpose.msra.mxu0 0.0
    %1316 = vmatpush.xpose.msra.mxu0 0.0
    %1317 = vmatpush.xpose.msra.mxu0 0.0
    %1318 = vmatpush.xpose.msra.mxu0 0.0
    %1319 = vmatpush.xpose.msra.mxu0 0.0
    %1320 = vmatpush.xpose.msra.mxu0 0.0
    %1321 = vmatpush.xpose.msra.mxu0 0.0
    %1322 = vmatpush.xpose.msra.mxu0 0.0
    %1323 = vmatpush.xpose.msra.mxu0 %v1306
    %1324 = vmatmul.f32.gmra.mxu0 %v1304
    %v1325 = vpop.f32.mrf.mxu0
    %v1326 = vadd.f32 0.0, %v1325
    %1327 = vdwg.mxu0
    %1328 = vrot.lane.b32.xlu0 %v1039, 112
    %v1329 = vpop.permute.xlu0 %1328
    %1330 = vrot.lane.b32.xlu0 %v1036, 80
    %v1331 = vpop.permute.xlu0 %1330
    %v1332 = vsel %vm226, %v1329, 0
    %v1334 = vsel %vm226, %v1331, 0
    %1336 = vmatpush.xpose.msra.mxu0 0.0
    %1337 = vmatpush.xpose.msra.mxu0 0.0
    %1338 = vmatpush.xpose.msra.mxu0 0.0
    %1339 = vmatpush.xpose.msra.mxu0 0.0
    %1340 = vmatpush.xpose.msra.mxu0 0.0
    %1341 = vmatpush.xpose.msra.mxu0 0.0
    %1342 = vmatpush.xpose.msra.mxu0 0.0
    %1343 = vmatpush.xpose.msra.mxu0 0.0
    %1344 = vmatpush.xpose.msra.mxu0 0.0
    %1345 = vmatpush.xpose.msra.mxu0 0.0
    %1346 = vmatpush.xpose.msra.mxu0 0.0
    %1347 = vmatpush.xpose.msra.mxu0 0.0
    %1348 = vmatpush.xpose.msra.mxu0 0.0
    %1349 = vmatpush.xpose.msra.mxu0 0.0
    %1350 = vmatpush.xpose.msra.mxu0 0.0
    %1351 = vmatpush.xpose.msra.mxu0 %v1334
    %1352 = vmatmul.f32.gmra.mxu0 %v1332
    %v1353 = vpop.f32.mrf.mxu0
    %v1354 = vadd.f32 0.0, %v1353
    %1355 = vdwg.mxu0
    %v1356 = vsel %vm226, %v1326, -inf
    %1357 = vmax.xlane.f32.xlu0 %v1356
    %v1358 = vpop.xlane.xlu0 %1357
    %v1359 = vsel %vm226, %v1354, -inf
    %1360 = vmax.xlane.f32.xlu0 %v1359
    %v1361 = vpop.xlane.xlu0 %1360
    %v1362 = vsub.f32 %v1326, %v1358
    %v1363 = vsub.f32 %v1354, %v1361
    %v1364 = vmul.f32 %v1362, 1.442695
    %v1365 = vpow.pop %v1364
    %v1366 = vmul.f32 %v1363, 1.442695
    %v1367 = vpow.pop %v1366
    %v1368 = vsel %vm226, %v1365, 0.0
    %1369 = vadd.xlane.f32.xlu0 %v1368
    %v1370 = vpop.xlane.xlu0 %1369
    %v1371 = vsel %vm226, %v1367, 0.0
    %1372 = vadd.xlane.f32.xlu0 %v1371
    %v1373 = vpop.xlane.xlu0 %1372
    %v1374 = vrcp.pop %v1370
    %v1375 = vrcp.pop %v1373
    %v1376 = vmul.f32 %v1365, %v1374
    %v1377 = vmul.f32 %v1367, %v1375
    %1378 = vrot.lane.b32.xlu0 %v1033, 48
    %v1379 = vpop.permute.xlu0 %1378
    %v1382 = vsel %vm226, %v1376, 0
    %1384 = vmatpush.msra.mxu0 0.0
    %1385 = vmatpush.msra.mxu0 0.0
    %1386 = vmatpush.msra.mxu0 0.0
    %1387 = vmatpush.msra.mxu0 0.0
    %1388 = vmatpush.msra.mxu0 0.0
    %1389 = vmatpush.msra.mxu0 0.0
    %1390 = vmatpush.msra.mxu0 0.0
    %1391 = vmatpush.msra.mxu0 0.0
    %1392 = vmatpush.msra.mxu0 0.0
    %1393 = vmatpush.msra.mxu0 0.0
    %1394 = vmatpush.msra.mxu0 0.0
    %1395 = vmatpush.msra.mxu0 0.0
    %1396 = vmatpush.msra.mxu0 0.0
    %1397 = vmatpush.msra.mxu0 0.0
    %1398 = vmatpush.msra.mxu0 0.0
    %1399 = vmatpush.msra.mxu0 %v1379
    %1400 = vmatmul.f32.gmra.mxu0 %v1382
    %v1401 = vpop.f32.mrf.mxu0
    %v1402 = vadd.f32 0.0, %v1401
    %1403 = vdwg.mxu0
    %1404 = vrot.lane.b32.xlu0 %v1036, 48
    %v1405 = vpop.permute.xlu0 %1404
    %v1408 = vsel %vm226, %v1377, 0
    %1410 = vmatpush.msra.mxu0 0.0
    %1411 = vmatpush.msra.mxu0 0.0
    %1412 = vmatpush.msra.mxu0 0.0
    %1413 = vmatpush.msra.mxu0 0.0
    %1414 = vmatpush.msra.mxu0 0.0
    %1415 = vmatpush.msra.mxu0 0.0
    %1416 = vmatpush.msra.mxu0 0.0
    %1417 = vmatpush.msra.mxu0 0.0
    %1418 = vmatpush.msra.mxu0 0.0
    %1419 = vmatpush.msra.mxu0 0.0
    %1420 = vmatpush.msra.mxu0 0.0
    %1421 = vmatpush.msra.mxu0 0.0
    %1422 = vmatpush.msra.mxu0 0.0
    %1423 = vmatpush.msra.mxu0 0.0
    %1424 = vmatpush.msra.mxu0 0.0
    %1425 = vmatpush.msra.mxu0 %v1405
    %1426 = vmatmul.f32.gmra.mxu0 %v1408
    %v1427 = vpop.f32.mrf.mxu0
    %v1428 = vadd.f32 0.0, %v1427
    %1429 = vdwg.mxu0
    %1430 = vrot.lane.b32.xlu0 %v1038, 104
    %v1431 = vpop.permute.xlu0 %1430
    %1432 = vrot.lane.b32.xlu0 %v1033, 72
    %v1433 = vpop.permute.xlu0 %1432
    %v1434 = vsel %vm226, %v1431, 0
    %v1436 = vsel %vm226, %v1433, 0
    %1438 = vmatpush.xpose.msra.mxu0 0.0
    %1439 = vmatpush.xpose.msra.mxu0 0.0
    %1440 = vmatpush.xpose.msra.mxu0 0.0
    %1441 = vmatpush.xpose.msra.mxu0 0.0
    %1442 = vmatpush.xpose.msra.mxu0 0.0
    %1443 = vmatpush.xpose.msra.mxu0 0.0
    %1444 = vmatpush.xpose.msra.mxu0 0.0
    %1445 = vmatpush.xpose.msra.mxu0 0.0
    %1446 = vmatpush.xpose.msra.mxu0 0.0
    %1447 = vmatpush.xpose.msra.mxu0 0.0
    %1448 = vmatpush.xpose.msra.mxu0 0.0
    %1449 = vmatpush.xpose.msra.mxu0 0.0
    %1450 = vmatpush.xpose.msra.mxu0 0.0
    %1451 = vmatpush.xpose.msra.mxu0 0.0
    %1452 = vmatpush.xpose.msra.mxu0 0.0
    %1453 = vmatpush.xpose.msra.mxu0 %v1436
    %1454 = vmatmul.f32.gmra.mxu0 %v1434
    %v1455 = vpop.f32.mrf.mxu0
    %v1456 = vadd.f32 0.0, %v1455
    %1457 = vdwg.mxu0
    %1458 = vrot.lane.b32.xlu0 %v1039, 104
    %v1459 = vpop.permute.xlu0 %1458
    %1460 = vrot.lane.b32.xlu0 %v1036, 72
    %v1461 = vpop.permute.xlu0 %1460
    %v1462 = vsel %vm226, %v1459, 0
    %v1464 = vsel %vm226, %v1461, 0
    %1466 = vmatpush.xpose.msra.mxu0 0.0
    %1467 = vmatpush.xpose.msra.mxu0 0.0
    %1468 = vmatpush.xpose.msra.mxu0 0.0
    %1469 = vmatpush.xpose.msra.mxu0 0.0
    %1470 = vmatpush.xpose.msra.mxu0 0.0
    %1471 = vmatpush.xpose.msra.mxu0 0.0
    %1472 = vmatpush.xpose.msra.mxu0 0.0
    %1473 = vmatpush.xpose.msra.mxu0 0.0
    %1474 = vmatpush.xpose.msra.mxu0 0.0
    %1475 = vmatpush.xpose.msra.mxu0 0.0
    %1476 = vmatpush.xpose.msra.mxu0 0.0
    %1477 = vmatpush.xpose.msra.mxu0 0.0
    %1478 = vmatpush.xpose.msra.mxu0 0.0
    %1479 = vmatpush.xpose.msra.mxu0 0.0
    %1480 = vmatpush.xpose.msra.mxu0 0.0
    %1481 = vmatpush.xpose.msra.mxu0 %v1464
    %1482 = vmatmul.f32.gmra.mxu0 %v1462
    %v1483 = vpop.f32.mrf.mxu0
    %v1484 = vadd.f32 0.0, %v1483
    %1485 = vdwg.mxu0
    %v1486 = vsel %vm226, %v1456, -inf
    %1487 = vmax.xlane.f32.xlu0 %v1486
    %v1488 = vpop.xlane.xlu0 %1487
    %v1489 = vsel %vm226, %v1484, -inf
    %1490 = vmax.xlane.f32.xlu0 %v1489
    %v1491 = vpop.xlane.xlu0 %1490
    %v1492 = vsub.f32 %v1456, %v1488
    %v1493 = vsub.f32 %v1484, %v1491
    %v1494 = vmul.f32 %v1492, 1.442695
    %v1495 = vpow.pop %v1494
    %v1496 = vmul.f32 %v1493, 1.442695
    %v1497 = vpow.pop %v1496
    %v1498 = vsel %vm226, %v1495, 0.0
    %1499 = vadd.xlane.f32.xlu0 %v1498
    %v1500 = vpop.xlane.xlu0 %1499
    %v1501 = vsel %vm226, %v1497, 0.0
    %1502 = vadd.xlane.f32.xlu0 %v1501
    %v1503 = vpop.xlane.xlu0 %1502
    %v1504 = vrcp.pop %v1500
    %v1505 = vrcp.pop %v1503
    %v1506 = vmul.f32 %v1495, %v1504
    %v1507 = vmul.f32 %v1497, %v1505
    %1508 = vrot.lane.b32.xlu0 %v1033, 40
    %v1509 = vpop.permute.xlu0 %1508
    %v1512 = vsel %vm226, %v1506, 0
    %1514 = vmatpush.msra.mxu0 0.0
    %1515 = vmatpush.msra.mxu0 0.0
    %1516 = vmatpush.msra.mxu0 0.0
    %1517 = vmatpush.msra.mxu0 0.0
    %1518 = vmatpush.msra.mxu0 0.0
    %1519 = vmatpush.msra.mxu0 0.0
    %1520 = vmatpush.msra.mxu0 0.0
    %1521 = vmatpush.msra.mxu0 0.0
    %1522 = vmatpush.msra.mxu0 0.0
    %1523 = vmatpush.msra.mxu0 0.0
    %1524 = vmatpush.msra.mxu0 0.0
    %1525 = vmatpush.msra.mxu0 0.0
    %1526 = vmatpush.msra.mxu0 0.0
    %1527 = vmatpush.msra.mxu0 0.0
    %1528 = vmatpush.msra.mxu0 0.0
    %1529 = vmatpush.msra.mxu0 %v1509
    %1530 = vmatmul.f32.gmra.mxu0 %v1512
    %v1531 = vpop.f32.mrf.mxu0
    %v1532 = vadd.f32 0.0, %v1531
    %1533 = vdwg.mxu0
    %1534 = vrot.lane.b32.xlu0 %v1036, 40
    %v1535 = vpop.permute.xlu0 %1534
    %v1538 = vsel %vm226, %v1507, 0
    %1540 = vmatpush.msra.mxu0 0.0
    %1541 = vmatpush.msra.mxu0 0.0
    %1542 = vmatpush.msra.mxu0 0.0
    %1543 = vmatpush.msra.mxu0 0.0
    %1544 = vmatpush.msra.mxu0 0.0
    %1545 = vmatpush.msra.mxu0 0.0
    %1546 = vmatpush.msra.mxu0 0.0
    %1547 = vmatpush.msra.mxu0 0.0
    %1548 = vmatpush.msra.mxu0 0.0
    %1549 = vmatpush.msra.mxu0 0.0
    %1550 = vmatpush.msra.mxu0 0.0
    %1551 = vmatpush.msra.mxu0 0.0
    %1552 = vmatpush.msra.mxu0 0.0
    %1553 = vmatpush.msra.mxu0 0.0
    %1554 = vmatpush.msra.mxu0 0.0
    %1555 = vmatpush.msra.mxu0 %v1535
    %1556 = vmatmul.f32.gmra.mxu0 %v1538
    %v1557 = vpop.f32.mrf.mxu0
    %v1558 = vadd.f32 0.0, %v1557
    %1559 = vdwg.mxu0
    %1562 = vrot.lane.b32.xlu0 %v1272, 8
    %v1563 = vpop.permute.xlu0 %1562
    %1564 = vrot.lane.b32.xlu0 %v1298, 8
    %v1565 = vpop.permute.xlu0 %1564
    %1570 = vrot.lane.b32.xlu0 %v1402, 16
    %v1571 = vpop.permute.xlu0 %1570
    %1572 = vrot.lane.b32.xlu0 %v1428, 16
    %v1573 = vpop.permute.xlu0 %1572
    %1578 = vrot.lane.b32.xlu0 %v1532, 24
    %v1579 = vpop.permute.xlu0 %1578
    %1580 = vrot.lane.b32.xlu0 %v1558, 24
    %v1581 = vpop.permute.xlu0 %1580
    %v1584 = vsel %vm226, %v1142, %v1563
    %v1585 = vsel %vm226, %v1168, %v1565
    %v1586 = vsel %vm770, %v1584, %v1571
    %v1587 = vsel %vm770, %v1585, %v1573
    %v1588 = vsel %vm773, %v1586, %v1579
    %v1589 = vsel %vm773, %v1587, %v1581
    %s1590 = scalar_lea.vmem %s4, 32
    %v1591 = vld [vmem:[%s1590] sm:$0xff]
    %v1592 = vld [vmem:[%s1590 + $0x8] sm:$0xff]
    %v1593 = vld [vmem:[%s1590 + $0x10] sm:$0xff]
    %v1594 = vld [vmem:[%s1590 + $0x18] sm:$0xff]
    %v1596 = vsel %vm126, %v1588, 0
    %v1599 = vsel %vm126, %v1589, 0
    %1601 = vmatpush.msra.mxu0 0.0
    %1602 = vmatpush.msra.mxu0 0.0
    %1603 = vmatpush.msra.mxu0 0.0
    %1604 = vmatpush.msra.mxu0 0.0
    %1605 = vmatpush.msra.mxu0 0.0
    %1606 = vmatpush.msra.mxu0 0.0
    %1607 = vmatpush.msra.mxu0 0.0
    %1608 = vmatpush.msra.mxu0 0.0
    %1609 = vmatpush.msra.mxu0 0.0
    %1610 = vmatpush.msra.mxu0 0.0
    %1611 = vmatpush.msra.mxu0 0.0
    %1612 = vmatpush.msra.mxu0 0.0
    %1613 = vmatpush.msra.mxu0 %v1594
    %1614 = vmatpush.msra.mxu0 %v1593
    %1615 = vmatpush.msra.mxu0 %v1592
    %1616 = vmatpush.msra.mxu0 %v1591
    %1617 = vmatmul.f32.gmra.mxu0 %v1596
    %v1618 = vpop.f32.mrf.mxu0
    %v1619 = vadd.f32 %v1002, %v1618
    %1620 = vmatmul.f32.gmra.mxu0 %v1599
    %v1621 = vpop.f32.mrf.mxu0
    %v1622 = vadd.f32 %v1003, %v1621
    %1623 = vdwg.mxu0
    %s1624 = scalar_lea.vmem %s5, 1
    %v1625 = vld [vmem:[%s1624] sm:$0x1]
    %s1626 = scalar_lea.vmem %s6, 1
    %v1627 = vld [vmem:[%s1626] sm:$0x1]
    %v1628 = vsel %vm126, %v1619, 0.0
    %1629 = vadd.xlane.f32.xlu0 %v1628
    %v1630 = vpop.xlane.xlu0 %1629
    %v1631 = vsel %vm126, %v1622, 0.0
    %1632 = vadd.xlane.f32.xlu0 %v1631
    %v1633 = vpop.xlane.xlu0 %1632
    %v1634 = vmul.f32 %v1630, %v139
    %v1635 = vmul.f32 %v1633, %v139
    %v1636 = vsub.f32 %v1619, %v1634
    %v1637 = vsub.f32 %v1622, %v1635
    %v1638 = vmul.f32 %v1636, %v1636
    %v1639 = vmul.f32 %v1637, %v1637
    %v1640 = vsel %vm126, %v1638, 0.0
    %1641 = vadd.xlane.f32.xlu0 %v1640
    %v1642 = vpop.xlane.xlu0 %1641
    %v1643 = vsel %vm126, %v1639, 0.0
    %1644 = vadd.xlane.f32.xlu0 %v1643
    %v1645 = vpop.xlane.xlu0 %1644
    %v1646 = vmul.f32 %v1642, %v139
    %v1647 = vmul.f32 %v1645, %v139
    %v1648 = vadd.f32 %v1646, 1e-06
    %v1649 = vadd.f32 %v1647, 1e-06
    %v1650 = vrsqrt.pop %v1648
    %v1651 = vmul.f32 %v1650, %v1648
    %v1652 = vmul.f32 %v1651, %v1650
    %v1653 = vmul.f32 0.5, %v1652
    %v1654 = vsub.f32 1.5, %v1653
    %v1655 = vmul.f32 %v1650, %v1654
    %vm1656 = vweird.f32 %v1648
    %vm1657 = vweird.f32 %v1650
    %vm1658 = vmor %vm1656, %vm1657
    %v1659 = vsel %vm1658, %v1650, %v1655
    %v1660 = vrsqrt.pop %v1649
    %v1661 = vmul.f32 %v1660, %v1649
    %v1662 = vmul.f32 %v1661, %v1660
    %v1663 = vmul.f32 0.5, %v1662
    %v1664 = vsub.f32 1.5, %v1663
    %v1665 = vmul.f32 %v1660, %v1664
    %vm1666 = vweird.f32 %v1649
    %vm1667 = vweird.f32 %v1660
    %vm1668 = vmor %vm1666, %vm1667
    %v1669 = vsel %vm1668, %v1660, %v1665
    %v1670 = vmul.f32 %v1636, %v1659
    %v1671 = vmul.f32 %v1637, %v1669
    %v1673 = vperm.slane %v1625, 0
    %v1675 = vmul.f32 %v1670, %v1673
    %v1676 = vmul.f32 %v1671, %v1673
    %v1678 = vperm.slane %v1627, 0
    %v1680 = vadd.f32 %v1675, %v1678
    %v1681 = vadd.f32 %v1676, %v1678
    %s1682 = scalar_lea.vmem %s7, 32
    %v1683 = vld [vmem:[%s1682] sm:$0xff]
    %v1684 = vld [vmem:[%s1682 + $0x8] sm:$0xff]
    %v1685 = vld [vmem:[%s1682 + $0x10] sm:$0xff]
    %v1686 = vld [vmem:[%s1682 + $0x18] sm:$0xff]
    %s1687 = scalar_lea.vmem [#allocation8], 1
    %v1688 = vld [vmem:[%s1687] sm:$0x1]
    %v1690 = vperm.slane %v1688, 0
    %v1693 = vsel %vm126, %v1680, 0
    %v1696 = vsel %vm126, %v1681, 0
    %1698 = vmatpush.msra.mxu0 0.0
    %1699 = vmatpush.msra.mxu0 0.0
    %1700 = vmatpush.msra.mxu0 0.0
    %1701 = vmatpush.msra.mxu0 0.0
    %1702 = vmatpush.msra.mxu0 0.0
    %1703 = vmatpush.msra.mxu0 0.0
    %1704 = vmatpush.msra.mxu0 0.0
    %1705 = vmatpush.msra.mxu0 0.0
    %1706 = vmatpush.msra.mxu0 0.0
    %1707 = vmatpush.msra.mxu0 0.0
    %1708 = vmatpush.msra.mxu0 0.0
    %1709 = vmatpush.msra.mxu0 0.0
    %1710 = vmatpush.msra.mxu0 %v1686
    %1711 = vmatpush.msra.mxu0 %v1685
    %1712 = vmatpush.msra.mxu0 %v1684
    %1713 = vmatpush.msra.mxu0 %v1683
    %1714 = vmatmul.f32.gmra.mxu0 %v1693
    %v1715 = vpop.f32.mrf.mxu0
    %v1716 = vadd.f32 %v1690, %v1715
    %1717 = vmatmul.f32.gmra.mxu0 %v1696
    %v1718 = vpop.f32.mrf.mxu0
    %v1719 = vadd.f32 %v1690, %v1718
    %1720 = vdwg.mxu0
    %v1721 = vmax.f32 %v1716, 0.0
    %v1722 = vmax.f32 %v1719, 0.0
    %s1723 = scalar_lea.vmem %s9, 64
    %v1724 = vld [vmem:[%s1723] sm:$0xff]
    %v1725 = vld [vmem:[%s1723 + $0x8] sm:$0xff]
    %v1726 = vld [vmem:[%s1723 + $0x10] sm:$0xff]
    %v1727 = vld [vmem:[%s1723 + $0x18] sm:$0xff]
    %v1728 = vld [vmem:[%s1723 + $0x20] sm:$0xff]
    %v1729 = vld [vmem:[%s1723 + $0x28] sm:$0xff]
    %v1730 = vld [vmem:[%s1723 + $0x30] sm:$0xff]
    %v1731 = vld [vmem:[%s1723 + $0x38] sm:$0xff]
    %s1732 = scalar_lea.vmem %s10, 1
    %v1733 = vld [vmem:[%s1732] sm:$0x1]
    %v1735 = vperm.slane %v1733, 0
    %v1738 = vsel %vm916, %v1721, 0
    %v1741 = vsel %vm916, %v1722, 0
    %1743 = vmatpush.msra.mxu0 0.0
    %1744 = vmatpush.msra.mxu0 0.0
    %1745 = vmatpush.msra.mxu0 0.0
    %1746 = vmatpush.msra.mxu0 0.0
    %1747 = vmatpush.msra.mxu0 0.0
    %1748 = vmatpush.msra.mxu0 0.0
    %1749 = vmatpush.msra.mxu0 0.0
    %1750 = vmatpush.msra.mxu0 0.0
    %1751 = vmatpush.msra.mxu0 %v1731
    %1752 = vmatpush.msra.mxu0 %v1730
    %1753 = vmatpush.msra.mxu0 %v1729
    %1754 = vmatpush.msra.mxu0 %v1728
    %1755 = vmatpush.msra.mxu0 %v1727
    %1756 = vmatpush.msra.mxu0 %v1726
    %1757 = vmatpush.msra.mxu0 %v1725
    %1758 = vmatpush.msra.mxu0 %v1724
    %1759 = vmatmul.f32.gmra.mxu0 %v1738
    %v1760 = vpop.f32.mrf.mxu0
    %v1761 = vadd.f32 %v1735, %v1760
    %1762 = vmatmul.f32.gmra.mxu0 %v1741
    %v1763 = vpop.f32.mrf.mxu0
    %v1764 = vadd.f32 %v1735, %v1763
    %1765 = vdwg.mxu0
    %v1766 = vadd.f32 %v1761, %v1680
    %v1767 = vadd.f32 %v1764, %v1681
    %s1768 = scalar_lea.vmem %s11, 1
    %v1769 = vld [vmem:[%s1768] sm:$0x1]
    %s1770 = scalar_lea.vmem %s12, 1
    %v1771 = vld [vmem:[%s1770] sm:$0x1]
    %v1772 = vsel %vm126, %v1766, 0.0
    %1773 = vadd.xlane.f32.xlu0 %v1772
    %v1774 = vpop.xlane.xlu0 %1773
    %v1775 = vsel %vm126, %v1767, 0.0
    %1776 = vadd.xlane.f32.xlu0 %v1775
    %v1777 = vpop.xlane.xlu0 %1776
    %v1778 = vmul.f32 %v1774, %v139
    %v1779 = vmul.f32 %v1777, %v139
    %v1780 = vsub.f32 %v1766, %v1778
    %v1781 = vsub.f32 %v1767, %v1779
    %v1782 = vmul.f32 %v1780, %v1780
    %v1783 = vmul.f32 %v1781, %v1781
    %v1784 = vsel %vm126, %v1782, 0.0
    %1785 = vadd.xlane.f32.xlu0 %v1784
    %v1786 = vpop.xlane.xlu0 %1785
    %v1787 = vsel %vm126, %v1783, 0.0
    %1788 = vadd.xlane.f32.xlu0 %v1787
    %v1789 = vpop.xlane.xlu0 %1788
    %v1790 = vmul.f32 %v1786, %v139
    %v1791 = vmul.f32 %v1789, %v139
    %v1792 = vadd.f32 %v1790, 1e-06
    %v1793 = vadd.f32 %v1791, 1e-06
    %v1794 = vrsqrt.pop %v1792
    %v1795 = vmul.f32 %v1794, %v1792
    %v1796 = vmul.f32 %v1795, %v1794
    %v1797 = vmul.f32 0.5, %v1796
    %v1798 = vsub.f32 1.5, %v1797
    %v1799 = vmul.f32 %v1794, %v1798
    %vm1800 = vweird.f32 %v1792
    %vm1801 = vweird.f32 %v1794
    %vm1802 = vmor %vm1800, %vm1801
    %v1803 = vsel %vm1802, %v1794, %v1799
    %v1804 = vrsqrt.pop %v1793
    %v1805 = vmul.f32 %v1804, %v1793
    %v1806 = vmul.f32 %v1805, %v1804
    %v1807 = vmul.f32 0.5, %v1806
    %v1808 = vsub.f32 1.5, %v1807
    %v1809 = vmul.f32 %v1804, %v1808
    %vm1810 = vweird.f32 %v1793
    %vm1811 = vweird.f32 %v1804
    %vm1812 = vmor %vm1810, %vm1811
    %v1813 = vsel %vm1812, %v1804, %v1809
    %v1814 = vmul.f32 %v1780, %v1803
    %v1815 = vmul.f32 %v1781, %v1813
    %v1817 = vperm.slane %v1769, 0
    %v1819 = vmul.f32 %v1814, %v1817
    %v1820 = vmul.f32 %v1815, %v1817
    %v1822 = vperm.slane %v1771, 0
    %v1824 = vadd.f32 %v1819, %v1822
    %v1825 = vadd.f32 %v1820, %v1822
    %v1827 = vrot.slane %v1824, 7
    %v1830 = vrot.slane %v1825, 6
    %vm1832 = vcmask 1040384
    %v1833 = vsel %vm1832, %v1827, %v1830
    %v1834 = vld [vmem:[#allocation10] sm:$0xff]
    %v1835 = vld [vmem:[#allocation10 + $0x8] sm:$0xff]
    %v1836 = vld [vmem:[#allocation10 + $0x10] sm:$0xff]
    %v1837 = vld [vmem:[#allocation10 + $0x18] sm:$0xff]
    %v1839 = vsel %vm126, %v1833, 0
    %1841 = vmatpush.msra.mxu0 0.0
    %1842 = vmatpush.msra.mxu0 0.0
    %1843 = vmatpush.msra.mxu0 0.0
    %1844 = vmatpush.msra.mxu0 0.0
    %1845 = vmatpush.msra.mxu0 0.0
    %1846 = vmatpush.msra.mxu0 0.0
    %1847 = vmatpush.msra.mxu0 0.0
    %1848 = vmatpush.msra.mxu0 0.0
    %1849 = vmatpush.msra.mxu0 0.0
    %1850 = vmatpush.msra.mxu0 0.0
    %1851 = vmatpush.msra.mxu0 0.0
    %1852 = vmatpush.msra.mxu0 0.0
    %1853 = vmatpush.msra.mxu0 %v1837
    %1854 = vmatpush.msra.mxu0 %v1836
    %1855 = vmatpush.msra.mxu0 %v1835
    %1856 = vmatpush.msra.mxu0 %v1834
    %1857 = vmatmul.f32.gmra.mxu0 %v1839
    %v1858 = vpop.f32.mrf.mxu0
    %v1859 = vadd.f32 0.0, %v1858
    %1860 = vdwg.mxu0
    %v1861 = vmul.f32 %v1859, 0.17677669
    %vm1862 = vcmask 222208
    %1863 = vst.msk [vmem:[#allocation11] sm:$0x3] %vm1862, %v1861
    // Predicated region
    $region78: #{tpu_custom_call.1} parent=1 // pred_check
      _
    $region79: #{tpu_custom_call.1} parent=1 // pred_check_branch
      %1865 = sbr.rel (0) target = $region81
    $region80: #{tpu_custom_call.1} parent=1 // pred_region
      %1867 = vsyncadd [#allocation4], 0
      %s1869 = sshll.u32 [#allocation11], 4
      %s1870 = int_to_ptr.vmem [resolvable:$true] %s1869
      %s1871 = sshll.u32 %s14, 4
      %s1872 = int_to_ptr.hbm [resolvable:$true] %s1871
      %1874 = dma.vmem_to_hbm [thread:$0]  %s1870, 32, %s1872, [#allocation4]
    $region81: #{tpu_custom_call.1} parent=1 // pred_fallthru
      _
    // Predicated region
    $region82: #{tpu_custom_call.1} parent=1 // pred_check
      _
    $region83: #{tpu_custom_call.1} parent=1 // pred_check_branch
      %1876 = sbr.rel (0) target = $region85
    $region84: #{tpu_custom_call.1} parent=1 // pred_region
      %1878 = dma.done [#allocation4], 32
    $region85: #{tpu_custom_call.1} parent=1 // pred_fallthru
      _
    %1879 = vsyncpa [#allocation3], 1
    %1880 = vsyncpa [#allocation6], 1
    %1881 = vsyncpa [#allocation9], 1
    %1882 = vsyncpa [#allocation4], 1

</llo_original>
